<compile_context>
chip_gen: v7x
topology: tpu7x:2x2x1
jax: 0.10.0
libtpu: 0.0.40
codegen_flags: <defaults>
</compile_context>

<pallas_src>
import jax
import jax.numpy as jnp
from jax.experimental import pallas as pl
from jax.experimental.pallas import tpu as pltpu

LEAKY_SLOPE = 0.2  # TODO(synk): modelLayers source unavailable; standard GAN slope assumed.

HIDDEN_PAD = 512   # 500 padded to a clean 4x128-lane width
OUT_PAD = 128      # lane-dense output; real out_dim sliced in the wrapper


def _disc_kernel(data_ref, labels_ref,
                 w1_ref, b1_ref,
                 w2d_ref, w2h_ref, b2_ref,
                 w3_ref, b3_ref,
                 w4_ref, b4_ref,
                 out_ref):
    """Fused forward pass for one batch tile (weights fully VMEM-resident)."""
    def lrelu(v):
        return jnp.where(v > 0, v, LEAKY_SLOPE * v)

    data = data_ref[...]                       # (TB, input_dim)  f32
    labels = labels_ref[...]                   # (TB, label_dim)  f32

    # input_layer_labels: Linear(label_dim -> input_dim) + LeakyReLU  (tiny, keep f32)
    h = lrelu(jnp.dot(labels, w1_ref[...], preferred_element_type=jnp.float32)
              + b1_ref[...])

    # Layer 2: concat([data, h]) @ W2  ==  data @ W2_data + h @ W2_h   (no lane concat)
    a1 = lrelu(
        jnp.dot(data.astype(jnp.bfloat16), w2d_ref[...],
                preferred_element_type=jnp.float32)
        + jnp.dot(h.astype(jnp.bfloat16), w2h_ref[...],
                  preferred_element_type=jnp.float32)
        + b2_ref[...])                         # (TB, 512); padded lanes stay 0

    # Layer 3: Linear(512,512) + LeakyReLU
    a2 = lrelu(jnp.dot(a1.astype(jnp.bfloat16), w3_ref[...],
                       preferred_element_type=jnp.float32)
               + b3_ref[...])                  # (TB, 512); padded lanes stay 0

    # Layer 4: Linear(512, OUT_PAD) + Sigmoid  (lane-dense, unmasked store)
    logits = jnp.dot(a2.astype(jnp.bfloat16), w4_ref[...],
                     preferred_element_type=jnp.float32) + b4_ref[...]
    out_ref[...] = jax.nn.sigmoid(logits).astype(out_ref.dtype)


def init_params(key, input_dim, output_dim, label_dim, hidden=500):
    """Deterministic PyTorch-Linear-style init: U(-1/sqrt(fan_in), 1/sqrt(fan_in))."""
    def linear(k, fan_in, fan_out):
        kw, kb = jax.random.split(k)
        bound = 1.0 / jnp.sqrt(fan_in)
        w = jax.random.uniform(kw, (fan_in, fan_out), jnp.float32, -bound, bound)
        b = jax.random.uniform(kb, (1, fan_out), jnp.float32, -bound, bound)
        return w, b

    k1, k2, k3, k4 = jax.random.split(key, 4)
    w1, b1 = linear(k1, label_dim, input_dim)
    w2, b2 = linear(k2, 2 * input_dim, hidden)
    w3, b3 = linear(k3, hidden, hidden)
    w4, b4 = linear(k4, hidden, output_dim)
    return {"w1": w1, "b1": b1, "w2": w2, "b2": b2,
            "w3": w3, "b3": b3, "w4": w4, "b4": b4}


def prepare_params(params, input_dim):
    """One-time kernel-layout prep: split W2, zero-pad to (512, 128), cast big weights to bf16."""
    hidden = params["w3"].shape[0]
    out_dim = params["w4"].shape[1]
    hpad = HIDDEN_PAD - hidden
    opad = OUT_PAD - out_dim

    def pad_cols(a, extra):
        return jnp.pad(a, ((0, 0), (0, extra)))

    w2 = params["w2"]
    w2d = pad_cols(w2[:input_dim], hpad).astype(jnp.bfloat16)   # (input_dim, 512)
    w2h = pad_cols(w2[input_dim:], hpad).astype(jnp.bfloat16)   # (input_dim, 512)
    b2 = pad_cols(params["b2"], hpad)                           # (1, 512) f32
    w3 = jnp.pad(params["w3"], ((0, hpad), (0, hpad))).astype(jnp.bfloat16)  # (512, 512)
    b3 = pad_cols(params["b3"], hpad)                           # (1, 512) f32
    w4 = jnp.pad(params["w4"], ((0, hpad), (0, opad))).astype(jnp.bfloat16)  # (512, 128)
    b4 = pad_cols(params["b4"], opad)                           # (1, 128) f32

    return {"w1": params["w1"], "b1": params["b1"],
            "w2d": w2d, "w2h": w2h, "b2": b2,
            "w3": w3, "b3": b3, "w4": w4, "b4": b4}


def _round_up(x, m):
    return (x + m - 1) // m * m


def ts_discriminator_linear(data, labels, prep, out_dim):
    """Pallas wrapper. data: (B, input_dim) f32, labels: (B, label_dim) f32.

    `prep` is the output of prepare_params(). Returns (B, out_dim) f32.
    """
    B, input_dim = data.shape
    label_dim = labels.shape[1]

    # Batch tiling: 256-row tiles for large B (fills the 256-wide MXU on v6e/v7x),
    # a single padded tile for small B.
    B8 = _round_up(B, 8)
    TB = 256 if B8 >= 256 else B8
    B_pad = _round_up(B8, TB)
    if B_pad != B:
        data = jnp.pad(data, ((0, B_pad - B), (0, 0)))
        labels = jnp.pad(labels, ((0, B_pad - B), (0, 0)))
    grid = (pl.cdiv(B_pad, TB),)

    def batch_spec(arr):
        return pl.BlockSpec((TB, arr.shape[1]), lambda i: (i, 0))

    def resident_spec(arr):
        # Weights/biases: full-array block, constant index -> stays VMEM-resident.
        return pl.BlockSpec(arr.shape, lambda i: (0, 0))

    weight_args = (prep["w1"], prep["b1"],
                   prep["w2d"], prep["w2h"], prep["b2"],
                   prep["w3"], prep["b3"],
                   prep["w4"], prep["b4"])

    out_padded = pl.pallas_call(
        _disc_kernel,
        out_shape=jax.ShapeDtypeStruct((B_pad, OUT_PAD), jnp.float32),
        grid=grid,
        in_specs=[batch_spec(data), batch_spec(labels)]
                 + [resident_spec(a) for a in weight_args],
        out_specs=pl.BlockSpec((TB, OUT_PAD), lambda i: (i, 0)),
        compiler_params=pltpu.CompilerParams(
            dimension_semantics=("parallel",)),
    )(data, labels, *weight_args)

    return out_padded[:B, :out_dim]


def _reference(data, labels, p):
    """Plain-JAX f32 reference (original, unpadded params) for correctness checking."""
    def lrelu(v):
        return jnp.where(v > 0, v, LEAKY_SLOPE * v)
    h = lrelu(labels @ p["w1"] + p["b1"])
    x = jnp.concatenate([data, h], axis=1)
    a1 = lrelu(x @ p["w2"] + p["b2"])
    a2 = lrelu(a1 @ p["w3"] + p["b3"])
    return jax.nn.sigmoid(a2 @ p["w4"] + p["b4"])


if __name__ == "__main__":
    batch = 8
    input_dim = 16     # time_step
    label_dim = 4      # number of classes
    output_dim = 1

    root = jax.random.PRNGKey(0)
    k_data, k_lab, k_par = jax.random.split(root, 3)

    data = jax.random.normal(k_data, (batch, input_dim), jnp.float32)
    # one-hot style label vectors, float (labels.float() in the torch forward)
    lab_idx = jax.random.randint(k_lab, (batch,), 0, label_dim)
    labels = jax.nn.one_hot(lab_idx, label_dim, dtype=jnp.float32)

    params = init_params(k_par, input_dim, output_dim, label_dim)
    prep = prepare_params(params, input_dim)

    out = jax.block_until_ready(
        ts_discriminator_linear(data, labels, prep, out_dim=output_dim))
    ref = _reference(data, labels, params)

    assert out.shape == (batch, output_dim), out.shape
    # bf16 weights + bf16 dot inputs (f32 accumulation) -> small deviation from f32 ref.
    assert jnp.allclose(out, ref, atol=2e-2, rtol=2e-2), (out, ref)
    print("KERNEL_OK")
</pallas_src>

<mosaic_0001>
module attributes {stable_mosaic.version = 11 : i64} {
  func.func @_disc_kernel(%arg0: i32, %arg1: memref<8x16xf32, #tpu.memory_space<vmem>>, %arg2: memref<8x4xf32, #tpu.memory_space<vmem>>, %arg3: memref<4x16xf32, #tpu.memory_space<vmem>>, %arg4: memref<1x16xf32, #tpu.memory_space<vmem>>, %arg5: memref<16x512xbf16, #tpu.memory_space<vmem>>, %arg6: memref<16x512xbf16, #tpu.memory_space<vmem>>, %arg7: memref<1x512xf32, #tpu.memory_space<vmem>>, %arg8: memref<512x512xbf16, #tpu.memory_space<vmem>>, %arg9: memref<1x512xf32, #tpu.memory_space<vmem>>, %arg10: memref<512x128xbf16, #tpu.memory_space<vmem>>, %arg11: memref<1x128xf32, #tpu.memory_space<vmem>>, %arg12: memref<8x128xf32, #tpu.memory_space<vmem>>) attributes {dimension_semantics = [#tpu.dimension_semantics<parallel>], iteration_bounds = array<i64: 1>, scalar_prefetch = 0 : i64, scratch_operands = 0 : i64, tpu.core_type = #tpu.core_type<tc>, window_params = [{transform_indices = @transform_0, window_bounds = array<i64: 8, 16>}, {transform_indices = @transform_1, window_bounds = array<i64: 8, 4>}, {pipeline_mode = #tpu.pipeline_mode<synchronous>, transform_indices = @transform_2, window_bounds = array<i64: 4, 16>}, {pipeline_mode = #tpu.pipeline_mode<synchronous>, transform_indices = @transform_3, window_bounds = array<i64: 1, 16>}, {pipeline_mode = #tpu.pipeline_mode<synchronous>, transform_indices = @transform_4, window_bounds = array<i64: 16, 512>}, {pipeline_mode = #tpu.pipeline_mode<synchronous>, transform_indices = @transform_5, window_bounds = array<i64: 16, 512>}, {pipeline_mode = #tpu.pipeline_mode<synchronous>, transform_indices = @transform_6, window_bounds = array<i64: 1, 512>}, {pipeline_mode = #tpu.pipeline_mode<synchronous>, transform_indices = @transform_7, window_bounds = array<i64: 512, 512>}, {pipeline_mode = #tpu.pipeline_mode<synchronous>, transform_indices = @transform_8, window_bounds = array<i64: 1, 512>}, {pipeline_mode = #tpu.pipeline_mode<synchronous>, transform_indices = @transform_9, window_bounds = array<i64: 512, 128>}, {pipeline_mode = #tpu.pipeline_mode<synchronous>, transform_indices = @transform_10, window_bounds = array<i64: 1, 128>}, {transform_indices = @transform_11, window_bounds = array<i64: 8, 128>}]} {
    %c0 = arith.constant 0 : index
    %c0_0 = arith.constant 0 : index
    %0 = vector.load %arg1[%c0, %c0_0] : memref<8x16xf32, #tpu.memory_space<vmem>>, vector<8x16xf32>
    %c0_1 = arith.constant 0 : index
    %c0_2 = arith.constant 0 : index
    %1 = vector.load %arg2[%c0_1, %c0_2] : memref<8x4xf32, #tpu.memory_space<vmem>>, vector<8x4xf32>
    %c0_3 = arith.constant 0 : index
    %c0_4 = arith.constant 0 : index
    %2 = vector.load %arg3[%c0_3, %c0_4] : memref<4x16xf32, #tpu.memory_space<vmem>>, vector<4x16xf32>
    %cst = arith.constant dense<0.000000e+00> : vector<8x16xf32>
    %3 = tpu.matmul %1, %2, %cst {dimension_numbers = #tpu.dot_dimension_numbers<[1], [0], [0], [1], [0, 0, 1, 1], [], []>} : vector<8x4xf32>, vector<4x16xf32>, vector<8x16xf32> -> vector<8x16xf32>
    %c0_5 = arith.constant 0 : index
    %c0_6 = arith.constant 0 : index
    %4 = vector.load %arg4[%c0_5, %c0_6] : memref<1x16xf32, #tpu.memory_space<vmem>>, vector<1x16xf32>
    %5 = vector.broadcast %4 : vector<1x16xf32> to vector<8x16xf32>
    %6 = arith.addf %3, %5 : vector<8x16xf32>
    %cst_7 = arith.constant 0.000000e+00 : f32
    %7 = vector.broadcast %cst_7 : f32 to vector<8x16xf32>
    %8 = arith.cmpf ogt, %6, %7 : vector<8x16xf32>
    %cst_8 = arith.constant 2.000000e-01 : f32
    %9 = vector.broadcast %cst_8 : f32 to vector<8x16xf32>
    %10 = arith.mulf %9, %6 : vector<8x16xf32>
    %11 = arith.select %8, %6, %10 : vector<8x16xi1>, vector<8x16xf32>
    %12 = arith.truncf %0 : vector<8x16xf32> to vector<8x16xbf16>
    %c0_9 = arith.constant 0 : index
    %c0_10 = arith.constant 0 : index
    %13 = vector.load %arg5[%c0_9, %c0_10] : memref<16x512xbf16, #tpu.memory_space<vmem>>, vector<16x512xbf16>
    %cst_11 = arith.constant dense<0.000000e+00> : vector<8x512xf32>
    %14 = tpu.matmul %12, %13, %cst_11 {dimension_numbers = #tpu.dot_dimension_numbers<[1], [0], [0], [1], [0, 0, 1, 1], [], []>} : vector<8x16xbf16>, vector<16x512xbf16>, vector<8x512xf32> -> vector<8x512xf32>
    %15 = arith.truncf %11 : vector<8x16xf32> to vector<8x16xbf16>
    %c0_12 = arith.constant 0 : index
    %c0_13 = arith.constant 0 : index
    %16 = vector.load %arg6[%c0_12, %c0_13] : memref<16x512xbf16, #tpu.memory_space<vmem>>, vector<16x512xbf16>
    %cst_14 = arith.constant dense<0.000000e+00> : vector<8x512xf32>
    %17 = tpu.matmul %15, %16, %cst_14 {dimension_numbers = #tpu.dot_dimension_numbers<[1], [0], [0], [1], [0, 0, 1, 1], [], []>} : vector<8x16xbf16>, vector<16x512xbf16>, vector<8x512xf32> -> vector<8x512xf32>
    %18 = arith.addf %14, %17 : vector<8x512xf32>
    %c0_15 = arith.constant 0 : index
    %c0_16 = arith.constant 0 : index
    %19 = vector.load %arg7[%c0_15, %c0_16] : memref<1x512xf32, #tpu.memory_space<vmem>>, vector<1x512xf32>
    %20 = vector.broadcast %19 : vector<1x512xf32> to vector<8x512xf32>
    %21 = arith.addf %18, %20 : vector<8x512xf32>
    %cst_17 = arith.constant 0.000000e+00 : f32
    %22 = vector.broadcast %cst_17 : f32 to vector<8x512xf32>
    %23 = arith.cmpf ogt, %21, %22 : vector<8x512xf32>
    %cst_18 = arith.constant 2.000000e-01 : f32
    %24 = vector.broadcast %cst_18 : f32 to vector<8x512xf32>
    %25 = arith.mulf %24, %21 : vector<8x512xf32>
    %26 = arith.select %23, %21, %25 : vector<8x512xi1>, vector<8x512xf32>
    %27 = arith.truncf %26 : vector<8x512xf32> to vector<8x512xbf16>
    %c0_19 = arith.constant 0 : index
    %c0_20 = arith.constant 0 : index
    %28 = vector.load %arg8[%c0_19, %c0_20] : memref<512x512xbf16, #tpu.memory_space<vmem>>, vector<512x512xbf16>
    %cst_21 = arith.constant dense<0.000000e+00> : vector<8x512xf32>
    %29 = tpu.matmul %27, %28, %cst_21 {dimension_numbers = #tpu.dot_dimension_numbers<[1], [0], [0], [1], [0, 0, 1, 1], [], []>} : vector<8x512xbf16>, vector<512x512xbf16>, vector<8x512xf32> -> vector<8x512xf32>
    %c0_22 = arith.constant 0 : index
    %c0_23 = arith.constant 0 : index
    %30 = vector.load %arg9[%c0_22, %c0_23] : memref<1x512xf32, #tpu.memory_space<vmem>>, vector<1x512xf32>
    %31 = vector.broadcast %30 : vector<1x512xf32> to vector<8x512xf32>
    %32 = arith.addf %29, %31 : vector<8x512xf32>
    %cst_24 = arith.constant 0.000000e+00 : f32
    %33 = vector.broadcast %cst_24 : f32 to vector<8x512xf32>
    %34 = arith.cmpf ogt, %32, %33 : vector<8x512xf32>
    %cst_25 = arith.constant 2.000000e-01 : f32
    %35 = vector.broadcast %cst_25 : f32 to vector<8x512xf32>
    %36 = arith.mulf %35, %32 : vector<8x512xf32>
    %37 = arith.select %34, %32, %36 : vector<8x512xi1>, vector<8x512xf32>
    %38 = arith.truncf %37 : vector<8x512xf32> to vector<8x512xbf16>
    %c0_26 = arith.constant 0 : index
    %c0_27 = arith.constant 0 : index
    %39 = vector.load %arg10[%c0_26, %c0_27] : memref<512x128xbf16, #tpu.memory_space<vmem>>, vector<512x128xbf16>
    %cst_28 = arith.constant dense<0.000000e+00> : vector<8x128xf32>
    %40 = tpu.matmul %38, %39, %cst_28 {dimension_numbers = #tpu.dot_dimension_numbers<[1], [0], [0], [1], [0, 0, 1, 1], [], []>} : vector<8x512xbf16>, vector<512x128xbf16>, vector<8x128xf32> -> vector<8x128xf32>
    %c0_29 = arith.constant 0 : index
    %c0_30 = arith.constant 0 : index
    %41 = vector.load %arg11[%c0_29, %c0_30] : memref<1x128xf32, #tpu.memory_space<vmem>>, vector<1x128xf32>
    %42 = vector.broadcast %41 : vector<1x128xf32> to vector<8x128xf32>
    %43 = arith.addf %40, %42 : vector<8x128xf32>
    %44 = arith.negf %43 : vector<8x128xf32>
    %45 = math.exp %44 : vector<8x128xf32>
    %cst_31 = arith.constant 1.000000e+00 : f32
    %46 = vector.broadcast %cst_31 : f32 to vector<8x128xf32>
    %47 = arith.addf %46, %45 : vector<8x128xf32>
    %48 = arith.divf %46, %47 : vector<8x128xf32>
    %c0_32 = arith.constant 0 : index
    %c0_33 = arith.constant 0 : index
    %49 = vector.load %arg12[%c0_32, %c0_33] : memref<8x128xf32, #tpu.memory_space<vmem>>, vector<8x128xf32>
    tpu.vector_store %arg12[%c0_32, %c0_33], %48 {strides = array<i32>} : memref<8x128xf32, #tpu.memory_space<vmem>>, vector<8x128xf32>,
    return
  }
  func.func @transform_0(%arg0: i32) -> (i32, i32) {
    %c0_i32 = arith.constant 0 : i32
    %c0_i32_0 = arith.constant 0 : i32
    return %arg0, %c0_i32 : i32, i32
  }
  func.func @transform_1(%arg0: i32) -> (i32, i32) {
    %c0_i32 = arith.constant 0 : i32
    %c0_i32_0 = arith.constant 0 : i32
    return %arg0, %c0_i32 : i32, i32
  }
  func.func @transform_2(%arg0: i32) -> (i32, i32) {
    %c0_i32 = arith.constant 0 : i32
    %c0_i32_0 = arith.constant 0 : i32
    %c0_i32_1 = arith.constant 0 : i32
    return %c0_i32, %c0_i32_0 : i32, i32
  }
  func.func @transform_3(%arg0: i32) -> (i32, i32) {
    %c0_i32 = arith.constant 0 : i32
    %c0_i32_0 = arith.constant 0 : i32
    %c0_i32_1 = arith.constant 0 : i32
    return %c0_i32, %c0_i32_0 : i32, i32
  }
  func.func @transform_4(%arg0: i32) -> (i32, i32) {
    %c0_i32 = arith.constant 0 : i32
    %c0_i32_0 = arith.constant 0 : i32
    %c0_i32_1 = arith.constant 0 : i32
    return %c0_i32, %c0_i32_0 : i32, i32
  }
  func.func @transform_5(%arg0: i32) -> (i32, i32) {
    %c0_i32 = arith.constant 0 : i32
    %c0_i32_0 = arith.constant 0 : i32
    %c0_i32_1 = arith.constant 0 : i32
    return %c0_i32, %c0_i32_0 : i32, i32
  }
  func.func @transform_6(%arg0: i32) -> (i32, i32) {
    %c0_i32 = arith.constant 0 : i32
    %c0_i32_0 = arith.constant 0 : i32
    %c0_i32_1 = arith.constant 0 : i32
    return %c0_i32, %c0_i32_0 : i32, i32
  }
  func.func @transform_7(%arg0: i32) -> (i32, i32) {
    %c0_i32 = arith.constant 0 : i32
    %c0_i32_0 = arith.constant 0 : i32
    %c0_i32_1 = arith.constant 0 : i32
    return %c0_i32, %c0_i32_0 : i32, i32
  }
  func.func @transform_8(%arg0: i32) -> (i32, i32) {
    %c0_i32 = arith.constant 0 : i32
    %c0_i32_0 = arith.constant 0 : i32
    %c0_i32_1 = arith.constant 0 : i32
    return %c0_i32, %c0_i32_0 : i32, i32
  }
  func.func @transform_9(%arg0: i32) -> (i32, i32) {
    %c0_i32 = arith.constant 0 : i32
    %c0_i32_0 = arith.constant 0 : i32
    %c0_i32_1 = arith.constant 0 : i32
    return %c0_i32, %c0_i32_0 : i32, i32
  }
  func.func @transform_10(%arg0: i32) -> (i32, i32) {
    %c0_i32 = arith.constant 0 : i32
    %c0_i32_0 = arith.constant 0 : i32
    %c0_i32_1 = arith.constant 0 : i32
    return %c0_i32, %c0_i32_0 : i32, i32
  }
  func.func @transform_11(%arg0: i32) -> (i32, i32) {
    %c0_i32 = arith.constant 0 : i32
    %c0_i32_0 = arith.constant 0 : i32
    return %arg0, %c0_i32 : i32, i32
  }
}

</mosaic_0001>

<llo_original>
// kernel: tpu_custom_call.1
$region0: #{tpu_custom_call.1}
  #allocation0 [shape = 'u32[]', space=smem, size = 0x4, offset = 0x4, fixed_abs, tag = 'smem constant byte address 0x4 - core index']
  #allocation1 [shape = 'u32[144,128]{1,0:T(1,128)}', space=vmem, size = 0x12000, scoped, tag = 'internal scratch']
  %s0 = inlined_call_operand.vmem [shape: f32[8,16], index: 0, kind: input, shape index: {}]
  %s1 = inlined_call_operand.vmem [shape: f32[8,4], index: 1, kind: input, shape index: {}]
  %s2 = inlined_call_operand.vmem [shape: f32[4,16], index: 2, kind: input, shape index: {}]
  %s3 = inlined_call_operand.vmem [shape: f32[1,16], index: 3, kind: input, shape index: {}]
  %s4 = inlined_call_operand.hbm [shape: bf16[16,512], index: 4, kind: input, shape index: {}]
  %s5 = inlined_call_operand.hbm [shape: bf16[16,512], index: 5, kind: input, shape index: {}]
  %s6 = inlined_call_operand.vmem [shape: f32[1,512], index: 6, kind: input, shape index: {}]
  %s7 = inlined_call_operand.hbm [shape: bf16[512,512], index: 7, kind: input, shape index: {}]
  %s8 = inlined_call_operand.vmem [shape: f32[1,512], index: 8, kind: input, shape index: {}]
  %s9 = inlined_call_operand.hbm [shape: bf16[512,128], index: 9, kind: input, shape index: {}]
  %s10 = inlined_call_operand.vmem [shape: f32[1,128], index: 10, kind: input, shape index: {}]
  %s11 = inlined_call_operand.hbm [shape: f32[8,128], index: 11, kind: output, shape index: {}]
  %s12 = sld [smem:[#allocation0]]
  $region70: #{tpu_custom_call.1} parent=0
    _
  %s14 = ssub.s32 1, %s12
  %s15 = scalar_select 0, %s14, %s12
  $region1: #{tpu_custom_call.1} parent=0
    #allocation2 [shape = 'u8[16384]{0}', space=vmem, size = 0x4000, scoped, tag = 'input window, operand 4, single buffered']
    #allocation3 [shape = 's32[1]{0}', space=sflag, size = 0x4, scoped, tag = 'scoped memory for tpu_custom_call.1']
    #allocation4 [shape = 's32[1]{0}', space=sflag, size = 0x4, scoped, tag = 'scoped memory for tpu_custom_call.1']
    #allocation5 [shape = 'u8[16384]{0}', space=vmem, size = 0x4000, scoped, tag = 'input window, operand 5, single buffered']
    #allocation6 [shape = 's32[1]{0}', space=sflag, size = 0x4, scoped, tag = 'scoped memory for tpu_custom_call.1']
    #allocation7 [shape = 'u8[524288]{0}', space=vmem, size = 0x80000, scoped, tag = 'input window, operand 7, single buffered']
    #allocation8 [shape = 'u8[131072]{0}', space=vmem, size = 0x20000, scoped, tag = 'input window, operand 9, single buffered']
    #allocation9 [shape = 's32[1]{0}', space=sflag, size = 0x4, scoped, tag = 'scoped memory for tpu_custom_call.1']
    #allocation10 [shape = 'u8[4096]{0}', space=vmem, size = 0x1000, scoped, tag = 'output window, operand 0, single buffered']
    %16 = vsyncpa [#allocation3], 0
    %17 = vsyncpa [#allocation6], 0
    %18 = vsyncpa [#allocation9], 0
    %19 = vsyncpa [#allocation4], 0
    // Predicated region
    $region2: #{tpu_custom_call.1} parent=1 // pred_check
      _
    $region3: #{tpu_custom_call.1} parent=1 // pred_check_branch
      %21 = sbr.rel (0) target = $region5
    $region4: #{tpu_custom_call.1} parent=1 // pred_region
      _
    $region5: #{tpu_custom_call.1} parent=1 // pred_fallthru
      _
    // Predicated region
    $region6: #{tpu_custom_call.1} parent=1 // pred_check
      _
    $region7: #{tpu_custom_call.1} parent=1 // pred_check_branch
      %23 = sbr.rel (0) target = $region9
    $region8: #{tpu_custom_call.1} parent=1 // pred_region
      _
    $region9: #{tpu_custom_call.1} parent=1 // pred_fallthru
      _
    // Predicated region
    $region10: #{tpu_custom_call.1} parent=1 // pred_check
      _
    $region11: #{tpu_custom_call.1} parent=1 // pred_check_branch
      %25 = sbr.rel (0) target = $region13
    $region12: #{tpu_custom_call.1} parent=1 // pred_region
      _
    $region13: #{tpu_custom_call.1} parent=1 // pred_fallthru
      _
    // Predicated region
    $region14: #{tpu_custom_call.1} parent=1 // pred_check
      _
    $region15: #{tpu_custom_call.1} parent=1 // pred_check_branch
      %27 = sbr.rel (0) target = $region17
    $region16: #{tpu_custom_call.1} parent=1 // pred_region
      _
    $region17: #{tpu_custom_call.1} parent=1 // pred_fallthru
      _
    // Predicated region
    $region18: #{tpu_custom_call.1} parent=1 // pred_check
      _
    $region19: #{tpu_custom_call.1} parent=1 // pred_check_branch
      %29 = sbr.rel (0) target = $region21
    $region20: #{tpu_custom_call.1} parent=1 // pred_region
      %s31 = ssub.s32 512, 512
      %32 = vsyncadd [#allocation3], %s31
      %s33 = sshll.u32 [#allocation2], 4
      %s34 = int_to_ptr.vmem [resolvable:$true] %s33
      %39 = dma.hbm_to_vmem [thread:$0]  %s4, 512, %s34, [#allocation3], 256, 256, 16
    $region21: #{tpu_custom_call.1} parent=1 // pred_fallthru
      _
    // Predicated region
    $region22: #{tpu_custom_call.1} parent=1 // pred_check
      _
    $region23: #{tpu_custom_call.1} parent=1 // pred_check_branch
      %41 = sbr.rel (0) target = $region25
    $region24: #{tpu_custom_call.1} parent=1 // pred_region
      %s43 = ssub.s32 512, 512
      %44 = vsyncadd [#allocation6], %s43
      %s45 = sshll.u32 [#allocation5], 4
      %s46 = int_to_ptr.vmem [resolvable:$true] %s45
      %51 = dma.hbm_to_vmem [thread:$0]  %s5, 512, %s46, [#allocation6], 256, 256, 16
    $region25: #{tpu_custom_call.1} parent=1 // pred_fallthru
      _
    // Predicated region
    $region26: #{tpu_custom_call.1} parent=1 // pred_check
      _
    $region27: #{tpu_custom_call.1} parent=1 // pred_check_branch
      %53 = sbr.rel (0) target = $region29
    $region28: #{tpu_custom_call.1} parent=1 // pred_region
      _
    $region29: #{tpu_custom_call.1} parent=1 // pred_fallthru
      _
    // Predicated region
    $region30: #{tpu_custom_call.1} parent=1 // pred_check
      _
    $region31: #{tpu_custom_call.1} parent=1 // pred_check_branch
      %55 = sbr.rel (0) target = $region33
    $region32: #{tpu_custom_call.1} parent=1 // pred_region
      %s57 = ssub.s32 16384, 16384
      %58 = vsyncadd [#allocation6], %s57
      %s59 = sshll.u32 [#allocation7], 4
      %s60 = int_to_ptr.vmem [resolvable:$true] %s59
      %65 = dma.hbm_to_vmem [thread:$0]  %s7, 16384, %s60, [#allocation6], 256, 256, 16
    $region33: #{tpu_custom_call.1} parent=1 // pred_fallthru
      _
    // Predicated region
    $region34: #{tpu_custom_call.1} parent=1 // pred_check
      _
    $region35: #{tpu_custom_call.1} parent=1 // pred_check_branch
      %67 = sbr.rel (0) target = $region37
    $region36: #{tpu_custom_call.1} parent=1 // pred_region
      _
    $region37: #{tpu_custom_call.1} parent=1 // pred_fallthru
      _
    // Predicated region
    $region38: #{tpu_custom_call.1} parent=1 // pred_check
      _
    $region39: #{tpu_custom_call.1} parent=1 // pred_check_branch
      %69 = sbr.rel (0) target = $region41
    $region40: #{tpu_custom_call.1} parent=1 // pred_region
      %s71 = ssub.s32 4096, 4096
      %72 = vsyncadd [#allocation9], %s71
      %s73 = sshll.u32 [#allocation8], 4
      %s74 = int_to_ptr.vmem [resolvable:$true] %s73
      %79 = dma.hbm_to_vmem [thread:$0]  %s9, 4096, %s74, [#allocation9], 64, 64, 4
    $region41: #{tpu_custom_call.1} parent=1 // pred_fallthru
      _
    // Predicated region
    $region42: #{tpu_custom_call.1} parent=1 // pred_check
      _
    $region43: #{tpu_custom_call.1} parent=1 // pred_check_branch
      %81 = sbr.rel (0) target = $region45
    $region44: #{tpu_custom_call.1} parent=1 // pred_region
      _
    $region45: #{tpu_custom_call.1} parent=1 // pred_fallthru
      _
    // Predicated region
    $region46: #{tpu_custom_call.1} parent=1 // pred_check
      _
    $region47: #{tpu_custom_call.1} parent=1 // pred_check_branch
      %83 = sbr.rel (0) target = $region49
    $region48: #{tpu_custom_call.1} parent=1 // pred_region
      %84 = dma.done [#allocation3], 512
    $region49: #{tpu_custom_call.1} parent=1 // pred_fallthru
      _
    // Predicated region
    $region50: #{tpu_custom_call.1} parent=1 // pred_check
      _
    $region51: #{tpu_custom_call.1} parent=1 // pred_check_branch
      %86 = sbr.rel (0) target = $region53
    $region52: #{tpu_custom_call.1} parent=1 // pred_region
      %87 = dma.done [#allocation6], 512
    $region53: #{tpu_custom_call.1} parent=1 // pred_fallthru
      _
    // Predicated region
    $region54: #{tpu_custom_call.1} parent=1 // pred_check
      _
    $region55: #{tpu_custom_call.1} parent=1 // pred_check_branch
      %89 = sbr.rel (0) target = $region57
    $region56: #{tpu_custom_call.1} parent=1 // pred_region
      %90 = dma.done [#allocation6], 16384
    $region57: #{tpu_custom_call.1} parent=1 // pred_fallthru
      _
    // Predicated region
    $region58: #{tpu_custom_call.1} parent=1 // pred_check
      _
    $region59: #{tpu_custom_call.1} parent=1 // pred_check_branch
      %92 = sbr.rel (0) target = $region61
    $region60: #{tpu_custom_call.1} parent=1 // pred_region
      %93 = dma.done [#allocation9], 4096
    $region61: #{tpu_custom_call.1} parent=1 // pred_fallthru
      _
    %v95 = vld [vmem:[%s0] sm:$0xff]
    %v96 = vld [vmem:[%s1] sm:$0xff]
    %v97 = vld [vmem:[%s2] sm:$0xf]
    %v98 = vld [vmem:[%s3] sm:$0x1]
    %v100 = vlaneseq
    %v101 = vshrl.u32 %v100, 7
    %v102 = vsub.s32 0, %v101
    %v103 = vrot.slane %v98, %v102
    %vm105 = vcmask 31744
    %v107 = vsel %vm105, %v96, 0
    %vm109 = vcmask 1043456
    %v111 = vsel %vm109, %v97, 0
    %113 = vmatprep.subr.mxu0 0.0
    %114 = vmatpush1.msra.mxu0 %v111
    %115 = vmatprep.subr.mxu0 0.0
    %116 = vmatpush1.msra.mxu0 0.0
    %117 = vmatprep.subr.mxu0 0.0
    %118 = vmatpush1.msra.mxu0 0.0
    %119 = vmatprep.subr.mxu0 0.0
    %120 = vmatpush1.msra.mxu0 0.0
    %121 = vmatprep.subr.mxu0 0.0
    %122 = vmatpush1.msra.mxu0 0.0
    %123 = vmatprep.subr.mxu0 0.0
    %124 = vmatpush1.msra.mxu0 0.0
    %125 = vmatprep.subr.mxu0 0.0
    %126 = vmatpush1.msra.mxu0 0.0
    %127 = vmatprep.subr.mxu0 0.0
    %128 = vmatpush1.msra.mxu0 0.0
    %129 = vmatprep.subr.mxu0 0.0
    %130 = vmatpush1.msra.mxu0 0.0
    %131 = vmatprep.subr.mxu0 0.0
    %132 = vmatpush1.msra.mxu0 0.0
    %133 = vmatprep.subr.mxu0 0.0
    %134 = vmatpush1.msra.mxu0 0.0
    %135 = vmatprep.subr.mxu0 0.0
    %136 = vmatpush1.msra.mxu0 0.0
    %137 = vmatprep.subr.mxu0 0.0
    %138 = vmatpush1.msra.mxu0 0.0
    %139 = vmatprep.subr.mxu0 0.0
    %140 = vmatpush1.msra.mxu0 0.0
    %141 = vmatprep.subr.mxu0 0.0
    %142 = vmatpush1.msra.mxu0 0.0
    %143 = vmatprep.subr.mxu0 0.0
    %144 = vmatpush1.msra.mxu0 0.0
    %145 = vmatprep.subr.mxu0 0.0
    %146 = vmatpush1.msra.mxu0 0.0
    %147 = vmatprep.subr.mxu0 0.0
    %148 = vmatpush1.msra.mxu0 0.0
    %149 = vmatprep.subr.mxu0 0.0
    %150 = vmatpush1.msra.mxu0 0.0
    %151 = vmatprep.subr.mxu0 0.0
    %152 = vmatpush1.msra.mxu0 0.0
    %153 = vmatprep.subr.mxu0 0.0
    %154 = vmatpush1.msra.mxu0 0.0
    %155 = vmatprep.subr.mxu0 0.0
    %156 = vmatpush1.msra.mxu0 0.0
    %157 = vmatprep.subr.mxu0 0.0
    %158 = vmatpush1.msra.mxu0 0.0
    %159 = vmatprep.subr.mxu0 0.0
    %160 = vmatpush1.msra.mxu0 0.0
    %161 = vmatprep.subr.mxu0 0.0
    %162 = vmatpush1.msra.mxu0 0.0
    %163 = vmatprep.subr.mxu0 0.0
    %164 = vmatpush1.msra.mxu0 0.0
    %165 = vmatprep.subr.mxu0 0.0
    %166 = vmatpush1.msra.mxu0 0.0
    %167 = vmatprep.subr.mxu0 0.0
    %168 = vmatpush1.msra.mxu0 0.0
    %169 = vmatprep.subr.mxu0 0.0
    %170 = vmatpush1.msra.mxu0 0.0
    %171 = vmatprep.subr.mxu0 0.0
    %172 = vmatpush1.msra.mxu0 0.0
    %173 = vmatprep.subr.mxu0 0.0
    %174 = vmatpush1.msra.mxu0 0.0
    %175 = vmatprep.subr.mxu0 0.0
    %176 = vmatpush1.msra.mxu0 0.0
    %177 = vmatprep.mubr.f32.mxu0 0.0
    %178 = vmatmul.mubr.f32.gmra.mrb[0].mxu0 %v107
    %v179 = vpop.f32.mrb[0].mxu0
    %v180 = vadd.f32 %v103, %v179
    %v181 = vpop.f32.mrb[0].mxu0
    %182 = vdwg.mxu0
    %vm183 = vcmp.gt.f32.partialorder %v180, 0.0
    %v184 = vmul.f32 %v180, 0.2
    %v185 = vsel %vm183, %v180, %v184
    %v186 = vpack.c.bf16 %v95, %v95
    %v187 = vld [vmem:[#allocation2] sm:$0xff]
    %v188 = vld [vmem:[#allocation2 + $0x8] sm:$0xff]
    %v189 = vld [vmem:[#allocation2 + $0x10] sm:$0xff]
    %v190 = vld [vmem:[#allocation2 + $0x18] sm:$0xff]
    %v191 = vpack.c.bf16 %v185, %v185
    %v192 = vld [vmem:[#allocation5] sm:$0xff]
    %v193 = vld [vmem:[#allocation5 + $0x8] sm:$0xff]
    %v194 = vld [vmem:[#allocation5 + $0x10] sm:$0xff]
    %v195 = vld [vmem:[#allocation5 + $0x18] sm:$0xff]
    %v200 = vunpack.c.l.b16 %v192
    %v201 = vunpack.c.h.b16 %v192
    %v202 = vunpack.c.l.b16 %v193
    %v203 = vunpack.c.h.b16 %v193
    %v204 = vunpack.c.l.b16 %v194
    %v205 = vunpack.c.h.b16 %v194
    %v206 = vunpack.c.l.b16 %v195
    %v207 = vunpack.c.h.b16 %v195
    %v208 = vpack.c.b16 %v204, %v200
    %v209 = vpack.c.b16 %v205, %v201
    %v210 = vpack.c.b16 %v206, %v202
    %v211 = vpack.c.b16 %v207, %v203
    %vm216 = vcmask 130048
    %v218 = vsel %vm216, %v191, 0
    %220 = vmatprep.subr.bf16.mxu0 %v209
    %221 = vmatpush1.bf16.msra.mxu0 %v208
    %222 = vmatprep.subr.bf16.mxu0 0
    %223 = vmatpush1.bf16.msra.mxu0 0
    %224 = vmatprep.subr.bf16.mxu0 0
    %225 = vmatpush1.bf16.msra.mxu0 0
    %226 = vmatprep.subr.bf16.mxu0 0
    %227 = vmatpush1.bf16.msra.mxu0 0
    %228 = vmatprep.subr.bf16.mxu0 0
    %229 = vmatpush1.bf16.msra.mxu0 0
    %230 = vmatprep.subr.bf16.mxu0 0
    %231 = vmatpush1.bf16.msra.mxu0 0
    %232 = vmatprep.subr.bf16.mxu0 0
    %233 = vmatpush1.bf16.msra.mxu0 0
    %234 = vmatprep.subr.bf16.mxu0 0
    %235 = vmatpush1.bf16.msra.mxu0 0
    %236 = vmatprep.subr.bf16.mxu0 0
    %237 = vmatpush1.bf16.msra.mxu0 0
    %238 = vmatprep.subr.bf16.mxu0 0
    %239 = vmatpush1.bf16.msra.mxu0 0
    %240 = vmatprep.subr.bf16.mxu0 0
    %241 = vmatpush1.bf16.msra.mxu0 0
    %242 = vmatprep.subr.bf16.mxu0 0
    %243 = vmatpush1.bf16.msra.mxu0 0
    %244 = vmatprep.subr.bf16.mxu0 0
    %245 = vmatpush1.bf16.msra.mxu0 0
    %246 = vmatprep.subr.bf16.mxu0 0
    %247 = vmatpush1.bf16.msra.mxu0 0
    %248 = vmatprep.subr.bf16.mxu0 0
    %249 = vmatpush1.bf16.msra.mxu0 0
    %250 = vmatprep.subr.bf16.mxu0 0
    %251 = vmatpush1.bf16.msra.mxu0 0
    %252 = vmatprep.mubr.bf16.mxu0 0
    %253 = vmatmul.mubr.bf16.gmra.mrb[0].mxu0 %v218
    %v254 = vpop.f32.mrb[0].mxu0
    %v255 = vadd.f32 0.0, %v254
    %v256 = vpop.f32.mrb[0].mxu0
    %v257 = vadd.f32 0.0, %v256
    %v258 = vpop.f32.mrb[0].mxu0
    %v259 = vpop.f32.mrb[0].mxu0
    %260 = vdwg.mxu0
    %261 = vmatprep.subr.bf16.mxu0 %v211
    %262 = vmatpush1.bf16.msra.mxu0 %v210
    %263 = vmatprep.subr.bf16.mxu0 0
    %264 = vmatpush1.bf16.msra.mxu0 0
    %265 = vmatprep.subr.bf16.mxu0 0
    %266 = vmatpush1.bf16.msra.mxu0 0
    %267 = vmatprep.subr.bf16.mxu0 0
    %268 = vmatpush1.bf16.msra.mxu0 0
    %269 = vmatprep.subr.bf16.mxu0 0
    %270 = vmatpush1.bf16.msra.mxu0 0
    %271 = vmatprep.subr.bf16.mxu0 0
    %272 = vmatpush1.bf16.msra.mxu0 0
    %273 = vmatprep.subr.bf16.mxu0 0
    %274 = vmatpush1.bf16.msra.mxu0 0
    %275 = vmatprep.subr.bf16.mxu0 0
    %276 = vmatpush1.bf16.msra.mxu0 0
    %277 = vmatprep.subr.bf16.mxu0 0
    %278 = vmatpush1.bf16.msra.mxu0 0
    %279 = vmatprep.subr.bf16.mxu0 0
    %280 = vmatpush1.bf16.msra.mxu0 0
    %281 = vmatprep.subr.bf16.mxu0 0
    %282 = vmatpush1.bf16.msra.mxu0 0
    %283 = vmatprep.subr.bf16.mxu0 0
    %284 = vmatpush1.bf16.msra.mxu0 0
    %285 = vmatprep.subr.bf16.mxu0 0
    %286 = vmatpush1.bf16.msra.mxu0 0
    %287 = vmatprep.subr.bf16.mxu0 0
    %288 = vmatpush1.bf16.msra.mxu0 0
    %289 = vmatprep.subr.bf16.mxu0 0
    %290 = vmatpush1.bf16.msra.mxu0 0
    %291 = vmatprep.subr.bf16.mxu0 0
    %292 = vmatpush1.bf16.msra.mxu0 0
    %293 = vmatprep.mubr.bf16.mxu0 0
    %294 = vmatmul.mubr.bf16.gmra.mrb[0].mxu0 %v218
    %v295 = vpop.f32.mrb[0].mxu0
    %v296 = vadd.f32 0.0, %v295
    %v297 = vpop.f32.mrb[0].mxu0
    %v298 = vadd.f32 0.0, %v297
    %v299 = vpop.f32.mrb[0].mxu0
    %v300 = vpop.f32.mrb[0].mxu0
    %301 = vdwg.mxu0
    %v306 = vunpack.c.l.b16 %v187
    %v307 = vunpack.c.h.b16 %v187
    %v308 = vunpack.c.l.b16 %v188
    %v309 = vunpack.c.h.b16 %v188
    %v310 = vunpack.c.l.b16 %v189
    %v311 = vunpack.c.h.b16 %v189
    %v312 = vunpack.c.l.b16 %v190
    %v313 = vunpack.c.h.b16 %v190
    %v314 = vpack.c.b16 %v310, %v306
    %v315 = vpack.c.b16 %v311, %v307
    %v316 = vpack.c.b16 %v312, %v308
    %v317 = vpack.c.b16 %v313, %v309
    %v323 = vsel %vm216, %v186, 0
    %325 = vmatprep.subr.bf16.mxu0 %v315
    %326 = vmatpush1.bf16.msra.mxu0 %v314
    %327 = vmatprep.subr.bf16.mxu0 0
    %328 = vmatpush1.bf16.msra.mxu0 0
    %329 = vmatprep.subr.bf16.mxu0 0
    %330 = vmatpush1.bf16.msra.mxu0 0
    %331 = vmatprep.subr.bf16.mxu0 0
    %332 = vmatpush1.bf16.msra.mxu0 0
    %333 = vmatprep.subr.bf16.mxu0 0
    %334 = vmatpush1.bf16.msra.mxu0 0
    %335 = vmatprep.subr.bf16.mxu0 0
    %336 = vmatpush1.bf16.msra.mxu0 0
    %337 = vmatprep.subr.bf16.mxu0 0
    %338 = vmatpush1.bf16.msra.mxu0 0
    %339 = vmatprep.subr.bf16.mxu0 0
    %340 = vmatpush1.bf16.msra.mxu0 0
    %341 = vmatprep.subr.bf16.mxu0 0
    %342 = vmatpush1.bf16.msra.mxu0 0
    %343 = vmatprep.subr.bf16.mxu0 0
    %344 = vmatpush1.bf16.msra.mxu0 0
    %345 = vmatprep.subr.bf16.mxu0 0
    %346 = vmatpush1.bf16.msra.mxu0 0
    %347 = vmatprep.subr.bf16.mxu0 0
    %348 = vmatpush1.bf16.msra.mxu0 0
    %349 = vmatprep.subr.bf16.mxu0 0
    %350 = vmatpush1.bf16.msra.mxu0 0
    %351 = vmatprep.subr.bf16.mxu0 0
    %352 = vmatpush1.bf16.msra.mxu0 0
    %353 = vmatprep.subr.bf16.mxu0 0
    %354 = vmatpush1.bf16.msra.mxu0 0
    %355 = vmatprep.subr.bf16.mxu0 0
    %356 = vmatpush1.bf16.msra.mxu0 0
    %357 = vmatprep.mubr.bf16.mxu0 0
    %358 = vmatmul.mubr.bf16.gmra.mrb[0].mxu0 %v323
    %v359 = vpop.f32.mrb[0].mxu0
    %v360 = vadd.f32 %v255, %v359
    %v361 = vpop.f32.mrb[0].mxu0
    %v362 = vadd.f32 %v257, %v361
    %v363 = vpop.f32.mrb[0].mxu0
    %v364 = vpop.f32.mrb[0].mxu0
    %365 = vdwg.mxu0
    %366 = vmatprep.subr.bf16.mxu0 %v317
    %367 = vmatpush1.bf16.msra.mxu0 %v316
    %368 = vmatprep.subr.bf16.mxu0 0
    %369 = vmatpush1.bf16.msra.mxu0 0
    %370 = vmatprep.subr.bf16.mxu0 0
    %371 = vmatpush1.bf16.msra.mxu0 0
    %372 = vmatprep.subr.bf16.mxu0 0
    %373 = vmatpush1.bf16.msra.mxu0 0
    %374 = vmatprep.subr.bf16.mxu0 0
    %375 = vmatpush1.bf16.msra.mxu0 0
    %376 = vmatprep.subr.bf16.mxu0 0
    %377 = vmatpush1.bf16.msra.mxu0 0
    %378 = vmatprep.subr.bf16.mxu0 0
    %379 = vmatpush1.bf16.msra.mxu0 0
    %380 = vmatprep.subr.bf16.mxu0 0
    %381 = vmatpush1.bf16.msra.mxu0 0
    %382 = vmatprep.subr.bf16.mxu0 0
    %383 = vmatpush1.bf16.msra.mxu0 0
    %384 = vmatprep.subr.bf16.mxu0 0
    %385 = vmatpush1.bf16.msra.mxu0 0
    %386 = vmatprep.subr.bf16.mxu0 0
    %387 = vmatpush1.bf16.msra.mxu0 0
    %388 = vmatprep.subr.bf16.mxu0 0
    %389 = vmatpush1.bf16.msra.mxu0 0
    %390 = vmatprep.subr.bf16.mxu0 0
    %391 = vmatpush1.bf16.msra.mxu0 0
    %392 = vmatprep.subr.bf16.mxu0 0
    %393 = vmatpush1.bf16.msra.mxu0 0
    %394 = vmatprep.subr.bf16.mxu0 0
    %395 = vmatpush1.bf16.msra.mxu0 0
    %396 = vmatprep.subr.bf16.mxu0 0
    %397 = vmatpush1.bf16.msra.mxu0 0
    %398 = vmatprep.mubr.bf16.mxu0 0
    %399 = vmatmul.mubr.bf16.gmra.mrb[0].mxu0 %v323
    %v400 = vpop.f32.mrb[0].mxu0
    %v401 = vadd.f32 %v296, %v400
    %v402 = vpop.f32.mrb[0].mxu0
    %v403 = vadd.f32 %v298, %v402
    %v404 = vpop.f32.mrb[0].mxu0
    %v405 = vpop.f32.mrb[0].mxu0
    %406 = vdwg.mxu0
    %v407 = vld [vmem:[%s6] sm:$0xf]
    %v409 = vlaneseq
    %v410 = vshrl.u32 %v409, 7
    %v411 = vsub.s32 0, %v410
    %v412 = vrot.slane %v407, %v411
    %v413 = vlaneseq
    %v414 = vshrl.u32 %v413, 7
    %v415 = vsub.s32 1, %v414
    %v416 = vrot.slane %v407, %v415
    %v417 = vlaneseq
    %v418 = vshrl.u32 %v417, 7
    %v419 = vsub.s32 2, %v418
    %v420 = vrot.slane %v407, %v419
    %v421 = vlaneseq
    %v422 = vshrl.u32 %v421, 7
    %v423 = vsub.s32 3, %v422
    %v424 = vrot.slane %v407, %v423
    %v429 = vadd.f32 %v360, %v412
    %v430 = vadd.f32 %v362, %v416
    %v431 = vadd.f32 %v401, %v420
    %v432 = vadd.f32 %v403, %v424
    %vm433 = vcmp.gt.f32.partialorder %v429, 0.0
    %vm434 = vcmp.gt.f32.partialorder %v430, 0.0
    %vm435 = vcmp.gt.f32.partialorder %v431, 0.0
    %vm436 = vcmp.gt.f32.partialorder %v432, 0.0
    %v437 = vmul.f32 %v429, 0.2
    %v438 = vmul.f32 %v430, 0.2
    %v439 = vmul.f32 %v431, 0.2
    %v440 = vmul.f32 %v432, 0.2
    %v441 = vsel %vm433, %v429, %v437
    %v442 = vsel %vm434, %v430, %v438
    %v443 = vsel %vm435, %v431, %v439
    %v444 = vsel %vm436, %v432, %v440
    %v445 = vpack.c.bf16 %v441, %v441
    %v446 = vpack.c.bf16 %v442, %v442
    %v447 = vpack.c.bf16 %v443, %v443
    %v448 = vpack.c.bf16 %v444, %v444
    %v449 = vld [vmem:[#allocation7] sm:$0xff]
    %v450 = vld [vmem:[#allocation7 + $0x8] sm:$0xff]
    %v451 = vld [vmem:[#allocation7 + $0x10] sm:$0xff]
    %v452 = vld [vmem:[#allocation7 + $0x18] sm:$0xff]
    %v453 = vld [vmem:[#allocation7 + $0x20] sm:$0xff]
    %v454 = vld [vmem:[#allocation7 + $0x28] sm:$0xff]
    %v455 = vld [vmem:[#allocation7 + $0x30] sm:$0xff]
    %v456 = vld [vmem:[#allocation7 + $0x38] sm:$0xff]
    %v457 = vld [vmem:[#allocation7 + $0x40] sm:$0xff]
    %v458 = vld [vmem:[#allocation7 + $0x48] sm:$0xff]
    %v459 = vld [vmem:[#allocation7 + $0x50] sm:$0xff]
    %v460 = vld [vmem:[#allocation7 + $0x58] sm:$0xff]
    %v461 = vld [vmem:[#allocation7 + $0x60] sm:$0xff]
    %v462 = vld [vmem:[#allocation7 + $0x68] sm:$0xff]
    %v463 = vld [vmem:[#allocation7 + $0x70] sm:$0xff]
    %v464 = vld [vmem:[#allocation7 + $0x78] sm:$0xff]
    %v465 = vld [vmem:[#allocation7 + $0x80] sm:$0xff]
    %v466 = vld [vmem:[#allocation7 + $0x88] sm:$0xff]
    %v467 = vld [vmem:[#allocation7 + $0x90] sm:$0xff]
    %v468 = vld [vmem:[#allocation7 + $0x98] sm:$0xff]
    %v469 = vld [vmem:[#allocation7 + $0xa0] sm:$0xff]
    %v470 = vld [vmem:[#allocation7 + $0xa8] sm:$0xff]
    %v471 = vld [vmem:[#allocation7 + $0xb0] sm:$0xff]
    %v472 = vld [vmem:[#allocation7 + $0xb8] sm:$0xff]
    %v473 = vld [vmem:[#allocation7 + $0xc0] sm:$0xff]
    %v474 = vld [vmem:[#allocation7 + $0xc8] sm:$0xff]
    %v475 = vld [vmem:[#allocation7 + $0xd0] sm:$0xff]
    %v476 = vld [vmem:[#allocation7 + $0xd8] sm:$0xff]
    %v477 = vld [vmem:[#allocation7 + $0xe0] sm:$0xff]
    %v478 = vld [vmem:[#allocation7 + $0xe8] sm:$0xff]
    %v479 = vld [vmem:[#allocation7 + $0xf0] sm:$0xff]
    %v480 = vld [vmem:[#allocation7 + $0xf8] sm:$0xff]
    %v481 = vld [vmem:[#allocation7 + $0x100] sm:$0xff]
    %v482 = vld [vmem:[#allocation7 + $0x108] sm:$0xff]
    %v483 = vld [vmem:[#allocation7 + $0x110] sm:$0xff]
    %v484 = vld [vmem:[#allocation7 + $0x118] sm:$0xff]
    %v485 = vld [vmem:[#allocation7 + $0x120] sm:$0xff]
    %v486 = vld [vmem:[#allocation7 + $0x128] sm:$0xff]
    %v487 = vld [vmem:[#allocation7 + $0x130] sm:$0xff]
    %v488 = vld [vmem:[#allocation7 + $0x138] sm:$0xff]
    %v489 = vld [vmem:[#allocation7 + $0x140] sm:$0xff]
    %v490 = vld [vmem:[#allocation7 + $0x148] sm:$0xff]
    %v491 = vld [vmem:[#allocation7 + $0x150] sm:$0xff]
    %v492 = vld [vmem:[#allocation7 + $0x158] sm:$0xff]
    %v493 = vld [vmem:[#allocation7 + $0x160] sm:$0xff]
    %v494 = vld [vmem:[#allocation7 + $0x168] sm:$0xff]
    %v495 = vld [vmem:[#allocation7 + $0x170] sm:$0xff]
    %v496 = vld [vmem:[#allocation7 + $0x178] sm:$0xff]
    %v497 = vld [vmem:[#allocation7 + $0x180] sm:$0xff]
    %v498 = vld [vmem:[#allocation7 + $0x188] sm:$0xff]
    %v499 = vld [vmem:[#allocation7 + $0x190] sm:$0xff]
    %v500 = vld [vmem:[#allocation7 + $0x198] sm:$0xff]
    %v501 = vld [vmem:[#allocation7 + $0x1a0] sm:$0xff]
    %v502 = vld [vmem:[#allocation7 + $0x1a8] sm:$0xff]
    %v503 = vld [vmem:[#allocation7 + $0x1b0] sm:$0xff]
    %v504 = vld [vmem:[#allocation7 + $0x1b8] sm:$0xff]
    %v505 = vld [vmem:[#allocation7 + $0x1c0] sm:$0xff]
    %v506 = vld [vmem:[#allocation7 + $0x1c8] sm:$0xff]
    %v507 = vld [vmem:[#allocation7 + $0x1d0] sm:$0xff]
    %v508 = vld [vmem:[#allocation7 + $0x1d8] sm:$0xff]
    %v509 = vld [vmem:[#allocation7 + $0x1e0] sm:$0xff]
    %v510 = vld [vmem:[#allocation7 + $0x1e8] sm:$0xff]
    %v511 = vld [vmem:[#allocation7 + $0x1f0] sm:$0xff]
    %v512 = vld [vmem:[#allocation7 + $0x1f8] sm:$0xff]
    %v513 = vld [vmem:[#allocation7 + $0x200] sm:$0xff]
    %v514 = vld [vmem:[#allocation7 + $0x208] sm:$0xff]
    %v515 = vld [vmem:[#allocation7 + $0x210] sm:$0xff]
    %v516 = vld [vmem:[#allocation7 + $0x218] sm:$0xff]
    %v517 = vld [vmem:[#allocation7 + $0x220] sm:$0xff]
    %v518 = vld [vmem:[#allocation7 + $0x228] sm:$0xff]
    %v519 = vld [vmem:[#allocation7 + $0x230] sm:$0xff]
    %v520 = vld [vmem:[#allocation7 + $0x238] sm:$0xff]
    %v521 = vld [vmem:[#allocation7 + $0x240] sm:$0xff]
    %v522 = vld [vmem:[#allocation7 + $0x248] sm:$0xff]
    %v523 = vld [vmem:[#allocation7 + $0x250] sm:$0xff]
    %v524 = vld [vmem:[#allocation7 + $0x258] sm:$0xff]
    %v525 = vld [vmem:[#allocation7 + $0x260] sm:$0xff]
    %v526 = vld [vmem:[#allocation7 + $0x268] sm:$0xff]
    %v527 = vld [vmem:[#allocation7 + $0x270] sm:$0xff]
    %v528 = vld [vmem:[#allocation7 + $0x278] sm:$0xff]
    %v529 = vld [vmem:[#allocation7 + $0x280] sm:$0xff]
    %v530 = vld [vmem:[#allocation7 + $0x288] sm:$0xff]
    %v531 = vld [vmem:[#allocation7 + $0x290] sm:$0xff]
    %v532 = vld [vmem:[#allocation7 + $0x298] sm:$0xff]
    %v533 = vld [vmem:[#allocation7 + $0x2a0] sm:$0xff]
    %v534 = vld [vmem:[#allocation7 + $0x2a8] sm:$0xff]
    %v535 = vld [vmem:[#allocation7 + $0x2b0] sm:$0xff]
    %v536 = vld [vmem:[#allocation7 + $0x2b8] sm:$0xff]
    %v537 = vld [vmem:[#allocation7 + $0x2c0] sm:$0xff]
    %v538 = vld [vmem:[#allocation7 + $0x2c8] sm:$0xff]
    %v539 = vld [vmem:[#allocation7 + $0x2d0] sm:$0xff]
    %v540 = vld [vmem:[#allocation7 + $0x2d8] sm:$0xff]
    %v541 = vld [vmem:[#allocation7 + $0x2e0] sm:$0xff]
    %v542 = vld [vmem:[#allocation7 + $0x2e8] sm:$0xff]
    %v543 = vld [vmem:[#allocation7 + $0x2f0] sm:$0xff]
    %v544 = vld [vmem:[#allocation7 + $0x2f8] sm:$0xff]
    %v545 = vld [vmem:[#allocation7 + $0x300] sm:$0xff]
    %v546 = vld [vmem:[#allocation7 + $0x308] sm:$0xff]
    %v547 = vld [vmem:[#allocation7 + $0x310] sm:$0xff]
    %v548 = vld [vmem:[#allocation7 + $0x318] sm:$0xff]
    %v549 = vld [vmem:[#allocation7 + $0x320] sm:$0xff]
    %v550 = vld [vmem:[#allocation7 + $0x328] sm:$0xff]
    %v551 = vld [vmem:[#allocation7 + $0x330] sm:$0xff]
    %v552 = vld [vmem:[#allocation7 + $0x338] sm:$0xff]
    %v553 = vld [vmem:[#allocation7 + $0x340] sm:$0xff]
    %v554 = vld [vmem:[#allocation7 + $0x348] sm:$0xff]
    %v555 = vld [vmem:[#allocation7 + $0x350] sm:$0xff]
    %v556 = vld [vmem:[#allocation7 + $0x358] sm:$0xff]
    %v557 = vld [vmem:[#allocation7 + $0x360] sm:$0xff]
    %v558 = vld [vmem:[#allocation7 + $0x368] sm:$0xff]
    %v559 = vld [vmem:[#allocation7 + $0x370] sm:$0xff]
    %v560 = vld [vmem:[#allocation7 + $0x378] sm:$0xff]
    %v561 = vld [vmem:[#allocation7 + $0x380] sm:$0xff]
    %v562 = vld [vmem:[#allocation7 + $0x388] sm:$0xff]
    %v563 = vld [vmem:[#allocation7 + $0x390] sm:$0xff]
    %v564 = vld [vmem:[#allocation7 + $0x398] sm:$0xff]
    %v565 = vld [vmem:[#allocation7 + $0x3a0] sm:$0xff]
    %v566 = vld [vmem:[#allocation7 + $0x3a8] sm:$0xff]
    %v567 = vld [vmem:[#allocation7 + $0x3b0] sm:$0xff]
    %v568 = vld [vmem:[#allocation7 + $0x3b8] sm:$0xff]
    %v569 = vld [vmem:[#allocation7 + $0x3c0] sm:$0xff]
    %v570 = vld [vmem:[#allocation7 + $0x3c8] sm:$0xff]
    %v571 = vld [vmem:[#allocation7 + $0x3d0] sm:$0xff]
    %v572 = vld [vmem:[#allocation7 + $0x3d8] sm:$0xff]
    %v573 = vld [vmem:[#allocation7 + $0x3e0] sm:$0xff]
    %v574 = vld [vmem:[#allocation7 + $0x3e8] sm:$0xff]
    %v575 = vld [vmem:[#allocation7 + $0x3f0] sm:$0xff]
    %v576 = vld [vmem:[#allocation7 + $0x3f8] sm:$0xff]
    %v577 = vld [vmem:[%s8] sm:$0xf]
    %v579 = vlaneseq
    %v580 = vshrl.u32 %v579, 7
    %v581 = vsub.s32 0, %v580
    %v582 = vrot.slane %v577, %v581
    %v583 = vlaneseq
    %v584 = vshrl.u32 %v583, 7
    %v585 = vsub.s32 1, %v584
    %v586 = vrot.slane %v577, %v585
    %v587 = vlaneseq
    %v588 = vshrl.u32 %v587, 7
    %v589 = vsub.s32 2, %v588
    %v590 = vrot.slane %v577, %v589
    %v591 = vlaneseq
    %v592 = vshrl.u32 %v591, 7
    %v593 = vsub.s32 3, %v592
    %v594 = vrot.slane %v577, %v593
    %v727 = vunpack.c.l.b16 %v449
    %v728 = vunpack.c.h.b16 %v449
    %v729 = vunpack.c.l.b16 %v450
    %v730 = vunpack.c.h.b16 %v450
    %v731 = vunpack.c.l.b16 %v451
    %v732 = vunpack.c.h.b16 %v451
    %v733 = vunpack.c.l.b16 %v452
    %v734 = vunpack.c.h.b16 %v452
    %v735 = vunpack.c.l.b16 %v453
    %v736 = vunpack.c.h.b16 %v453
    %v737 = vunpack.c.l.b16 %v454
    %v738 = vunpack.c.h.b16 %v454
    %v739 = vunpack.c.l.b16 %v455
    %v740 = vunpack.c.h.b16 %v455
    %v741 = vunpack.c.l.b16 %v456
    %v742 = vunpack.c.h.b16 %v456
    %v743 = vunpack.c.l.b16 %v457
    %v744 = vunpack.c.h.b16 %v457
    %v745 = vunpack.c.l.b16 %v458
    %v746 = vunpack.c.h.b16 %v458
    %v747 = vunpack.c.l.b16 %v459
    %v748 = vunpack.c.h.b16 %v459
    %v749 = vunpack.c.l.b16 %v460
    %v750 = vunpack.c.h.b16 %v460
    %v751 = vunpack.c.l.b16 %v461
    %v752 = vunpack.c.h.b16 %v461
    %v753 = vunpack.c.l.b16 %v462
    %v754 = vunpack.c.h.b16 %v462
    %v755 = vunpack.c.l.b16 %v463
    %v756 = vunpack.c.h.b16 %v463
    %v757 = vunpack.c.l.b16 %v464
    %v758 = vunpack.c.h.b16 %v464
    %v759 = vunpack.c.l.b16 %v465
    %v760 = vunpack.c.h.b16 %v465
    %v761 = vunpack.c.l.b16 %v466
    %v762 = vunpack.c.h.b16 %v466
    %v763 = vunpack.c.l.b16 %v467
    %v764 = vunpack.c.h.b16 %v467
    %v765 = vunpack.c.l.b16 %v468
    %v766 = vunpack.c.h.b16 %v468
    %v767 = vunpack.c.l.b16 %v469
    %v768 = vunpack.c.h.b16 %v469
    %v769 = vunpack.c.l.b16 %v470
    %v770 = vunpack.c.h.b16 %v470
    %v771 = vunpack.c.l.b16 %v471
    %v772 = vunpack.c.h.b16 %v471
    %v773 = vunpack.c.l.b16 %v472
    %v774 = vunpack.c.h.b16 %v472
    %v775 = vunpack.c.l.b16 %v473
    %v776 = vunpack.c.h.b16 %v473
    %v777 = vunpack.c.l.b16 %v474
    %v778 = vunpack.c.h.b16 %v474
    %v779 = vunpack.c.l.b16 %v475
    %v780 = vunpack.c.h.b16 %v475
    %v781 = vunpack.c.l.b16 %v476
    %v782 = vunpack.c.h.b16 %v476
    %v783 = vunpack.c.l.b16 %v477
    %v784 = vunpack.c.h.b16 %v477
    %v785 = vunpack.c.l.b16 %v478
    %v786 = vunpack.c.h.b16 %v478
    %v787 = vunpack.c.l.b16 %v479
    %v788 = vunpack.c.h.b16 %v479
    %v789 = vunpack.c.l.b16 %v480
    %v790 = vunpack.c.h.b16 %v480
    %v791 = vunpack.c.l.b16 %v481
    %v792 = vunpack.c.h.b16 %v481
    %v793 = vunpack.c.l.b16 %v482
    %v794 = vunpack.c.h.b16 %v482
    %v795 = vunpack.c.l.b16 %v483
    %v796 = vunpack.c.h.b16 %v483
    %v797 = vunpack.c.l.b16 %v484
    %v798 = vunpack.c.h.b16 %v484
    %v799 = vunpack.c.l.b16 %v485
    %v800 = vunpack.c.h.b16 %v485
    %v801 = vunpack.c.l.b16 %v486
    %v802 = vunpack.c.h.b16 %v486
    %v803 = vunpack.c.l.b16 %v487
    %v804 = vunpack.c.h.b16 %v487
    %v805 = vunpack.c.l.b16 %v488
    %v806 = vunpack.c.h.b16 %v488
    %v807 = vunpack.c.l.b16 %v489
    %v808 = vunpack.c.h.b16 %v489
    %v809 = vunpack.c.l.b16 %v490
    %v810 = vunpack.c.h.b16 %v490
    %v811 = vunpack.c.l.b16 %v491
    %v812 = vunpack.c.h.b16 %v491
    %v813 = vunpack.c.l.b16 %v492
    %v814 = vunpack.c.h.b16 %v492
    %v815 = vunpack.c.l.b16 %v493
    %v816 = vunpack.c.h.b16 %v493
    %v817 = vunpack.c.l.b16 %v494
    %v818 = vunpack.c.h.b16 %v494
    %v819 = vunpack.c.l.b16 %v495
    %v820 = vunpack.c.h.b16 %v495
    %v821 = vunpack.c.l.b16 %v496
    %v822 = vunpack.c.h.b16 %v496
    %v823 = vunpack.c.l.b16 %v497
    %v824 = vunpack.c.h.b16 %v497
    %v825 = vunpack.c.l.b16 %v498
    %v826 = vunpack.c.h.b16 %v498
    %v827 = vunpack.c.l.b16 %v499
    %v828 = vunpack.c.h.b16 %v499
    %v829 = vunpack.c.l.b16 %v500
    %v830 = vunpack.c.h.b16 %v500
    %v831 = vunpack.c.l.b16 %v501
    %v832 = vunpack.c.h.b16 %v501
    %v833 = vunpack.c.l.b16 %v502
    %v834 = vunpack.c.h.b16 %v502
    %v835 = vunpack.c.l.b16 %v503
    %v836 = vunpack.c.h.b16 %v503
    %v837 = vunpack.c.l.b16 %v504
    %v838 = vunpack.c.h.b16 %v504
    %v839 = vunpack.c.l.b16 %v505
    %v840 = vunpack.c.h.b16 %v505
    %v841 = vunpack.c.l.b16 %v506
    %v842 = vunpack.c.h.b16 %v506
    %v843 = vunpack.c.l.b16 %v507
    %v844 = vunpack.c.h.b16 %v507
    %v845 = vunpack.c.l.b16 %v508
    %v846 = vunpack.c.h.b16 %v508
    %v847 = vunpack.c.l.b16 %v509
    %v848 = vunpack.c.h.b16 %v509
    %v849 = vunpack.c.l.b16 %v510
    %v850 = vunpack.c.h.b16 %v510
    %v851 = vunpack.c.l.b16 %v511
    %v852 = vunpack.c.h.b16 %v511
    %v853 = vunpack.c.l.b16 %v512
    %v854 = vunpack.c.h.b16 %v512
    %v855 = vunpack.c.l.b16 %v513
    %v856 = vunpack.c.h.b16 %v513
    %v857 = vunpack.c.l.b16 %v514
    %v858 = vunpack.c.h.b16 %v514
    %v859 = vunpack.c.l.b16 %v515
    %v860 = vunpack.c.h.b16 %v515
    %v861 = vunpack.c.l.b16 %v516
    %v862 = vunpack.c.h.b16 %v516
    %v863 = vunpack.c.l.b16 %v517
    %v864 = vunpack.c.h.b16 %v517
    %v865 = vunpack.c.l.b16 %v518
    %v866 = vunpack.c.h.b16 %v518
    %v867 = vunpack.c.l.b16 %v519
    %v868 = vunpack.c.h.b16 %v519
    %v869 = vunpack.c.l.b16 %v520
    %v870 = vunpack.c.h.b16 %v520
    %v871 = vunpack.c.l.b16 %v521
    %v872 = vunpack.c.h.b16 %v521
    %v873 = vunpack.c.l.b16 %v522
    %v874 = vunpack.c.h.b16 %v522
    %v875 = vunpack.c.l.b16 %v523
    %v876 = vunpack.c.h.b16 %v523
    %v877 = vunpack.c.l.b16 %v524
    %v878 = vunpack.c.h.b16 %v524
    %v879 = vunpack.c.l.b16 %v525
    %v880 = vunpack.c.h.b16 %v525
    %v881 = vunpack.c.l.b16 %v526
    %v882 = vunpack.c.h.b16 %v526
    %v883 = vunpack.c.l.b16 %v527
    %v884 = vunpack.c.h.b16 %v527
    %v885 = vunpack.c.l.b16 %v528
    %v886 = vunpack.c.h.b16 %v528
    %v887 = vunpack.c.l.b16 %v529
    %v888 = vunpack.c.h.b16 %v529
    %v889 = vunpack.c.l.b16 %v530
    %v890 = vunpack.c.h.b16 %v530
    %v891 = vunpack.c.l.b16 %v531
    %v892 = vunpack.c.h.b16 %v531
    %v893 = vunpack.c.l.b16 %v532
    %v894 = vunpack.c.h.b16 %v532
    %v895 = vunpack.c.l.b16 %v533
    %v896 = vunpack.c.h.b16 %v533
    %v897 = vunpack.c.l.b16 %v534
    %v898 = vunpack.c.h.b16 %v534
    %v899 = vunpack.c.l.b16 %v535
    %v900 = vunpack.c.h.b16 %v535
    %v901 = vunpack.c.l.b16 %v536
    %v902 = vunpack.c.h.b16 %v536
    %v903 = vunpack.c.l.b16 %v537
    %v904 = vunpack.c.h.b16 %v537
    %v905 = vunpack.c.l.b16 %v538
    %v906 = vunpack.c.h.b16 %v538
    %v907 = vunpack.c.l.b16 %v539
    %v908 = vunpack.c.h.b16 %v539
    %v909 = vunpack.c.l.b16 %v540
    %v910 = vunpack.c.h.b16 %v540
    %v911 = vunpack.c.l.b16 %v541
    %v912 = vunpack.c.h.b16 %v541
    %v913 = vunpack.c.l.b16 %v542
    %v914 = vunpack.c.h.b16 %v542
    %v915 = vunpack.c.l.b16 %v543
    %v916 = vunpack.c.h.b16 %v543
    %v917 = vunpack.c.l.b16 %v544
    %v918 = vunpack.c.h.b16 %v544
    %v919 = vunpack.c.l.b16 %v545
    %v920 = vunpack.c.h.b16 %v545
    %v921 = vunpack.c.l.b16 %v546
    %v922 = vunpack.c.h.b16 %v546
    %v923 = vunpack.c.l.b16 %v547
    %v924 = vunpack.c.h.b16 %v547
    %v925 = vunpack.c.l.b16 %v548
    %v926 = vunpack.c.h.b16 %v548
    %v927 = vunpack.c.l.b16 %v549
    %v928 = vunpack.c.h.b16 %v549
    %v929 = vunpack.c.l.b16 %v550
    %v930 = vunpack.c.h.b16 %v550
    %v931 = vunpack.c.l.b16 %v551
    %v932 = vunpack.c.h.b16 %v551
    %v933 = vunpack.c.l.b16 %v552
    %v934 = vunpack.c.h.b16 %v552
    %v935 = vunpack.c.l.b16 %v553
    %v936 = vunpack.c.h.b16 %v553
    %v937 = vunpack.c.l.b16 %v554
    %v938 = vunpack.c.h.b16 %v554
    %v939 = vunpack.c.l.b16 %v555
    %v940 = vunpack.c.h.b16 %v555
    %v941 = vunpack.c.l.b16 %v556
    %v942 = vunpack.c.h.b16 %v556
    %v943 = vunpack.c.l.b16 %v557
    %v944 = vunpack.c.h.b16 %v557
    %v945 = vunpack.c.l.b16 %v558
    %v946 = vunpack.c.h.b16 %v558
    %v947 = vunpack.c.l.b16 %v559
    %v948 = vunpack.c.h.b16 %v559
    %v949 = vunpack.c.l.b16 %v560
    %v950 = vunpack.c.h.b16 %v560
    %v951 = vunpack.c.l.b16 %v561
    %v952 = vunpack.c.h.b16 %v561
    %v953 = vunpack.c.l.b16 %v562
    %v954 = vunpack.c.h.b16 %v562
    %v955 = vunpack.c.l.b16 %v563
    %v956 = vunpack.c.h.b16 %v563
    %v957 = vunpack.c.l.b16 %v564
    %v958 = vunpack.c.h.b16 %v564
    %v959 = vunpack.c.l.b16 %v565
    %v960 = vunpack.c.h.b16 %v565
    %v961 = vunpack.c.l.b16 %v566
    %v962 = vunpack.c.h.b16 %v566
    %v963 = vunpack.c.l.b16 %v567
    %v964 = vunpack.c.h.b16 %v567
    %v965 = vunpack.c.l.b16 %v568
    %v966 = vunpack.c.h.b16 %v568
    %v967 = vunpack.c.l.b16 %v569
    %v968 = vunpack.c.h.b16 %v569
    %v969 = vunpack.c.l.b16 %v570
    %v970 = vunpack.c.h.b16 %v570
    %v971 = vunpack.c.l.b16 %v571
    %v972 = vunpack.c.h.b16 %v571
    %v973 = vunpack.c.l.b16 %v572
    %v974 = vunpack.c.h.b16 %v572
    %v975 = vunpack.c.l.b16 %v573
    %v976 = vunpack.c.h.b16 %v573
    %v977 = vunpack.c.l.b16 %v574
    %v978 = vunpack.c.h.b16 %v574
    %v979 = vunpack.c.l.b16 %v575
    %v980 = vunpack.c.h.b16 %v575
    %v981 = vunpack.c.l.b16 %v576
    %v982 = vunpack.c.h.b16 %v576
    %v983 = vpack.c.b16 %v731, %v727
    %v984 = vpack.c.b16 %v732, %v728
    %v985 = vpack.c.b16 %v733, %v729
    %v986 = vpack.c.b16 %v734, %v730
    %v987 = vpack.c.b16 %v739, %v735
    %v988 = vpack.c.b16 %v740, %v736
    %v989 = vpack.c.b16 %v741, %v737
    %v990 = vpack.c.b16 %v742, %v738
    %v991 = vpack.c.b16 %v747, %v743
    %v992 = vpack.c.b16 %v748, %v744
    %v993 = vpack.c.b16 %v749, %v745
    %v994 = vpack.c.b16 %v750, %v746
    %v995 = vpack.c.b16 %v755, %v751
    %v996 = vpack.c.b16 %v756, %v752
    %v997 = vpack.c.b16 %v757, %v753
    %v998 = vpack.c.b16 %v758, %v754
    %v999 = vpack.c.b16 %v763, %v759
    %v1000 = vpack.c.b16 %v764, %v760
    %v1001 = vpack.c.b16 %v765, %v761
    %v1002 = vpack.c.b16 %v766, %v762
    %v1003 = vpack.c.b16 %v771, %v767
    %v1004 = vpack.c.b16 %v772, %v768
    %v1005 = vpack.c.b16 %v773, %v769
    %v1006 = vpack.c.b16 %v774, %v770
    %v1007 = vpack.c.b16 %v779, %v775
    %v1008 = vpack.c.b16 %v780, %v776
    %v1009 = vpack.c.b16 %v781, %v777
    %v1010 = vpack.c.b16 %v782, %v778
    %v1011 = vpack.c.b16 %v787, %v783
    %v1012 = vpack.c.b16 %v788, %v784
    %v1013 = vpack.c.b16 %v789, %v785
    %v1014 = vpack.c.b16 %v790, %v786
    %v1015 = vpack.c.b16 %v795, %v791
    %v1016 = vpack.c.b16 %v796, %v792
    %v1017 = vpack.c.b16 %v797, %v793
    %v1018 = vpack.c.b16 %v798, %v794
    %v1019 = vpack.c.b16 %v803, %v799
    %v1020 = vpack.c.b16 %v804, %v800
    %v1021 = vpack.c.b16 %v805, %v801
    %v1022 = vpack.c.b16 %v806, %v802
    %v1023 = vpack.c.b16 %v811, %v807
    %v1024 = vpack.c.b16 %v812, %v808
    %v1025 = vpack.c.b16 %v813, %v809
    %v1026 = vpack.c.b16 %v814, %v810
    %v1027 = vpack.c.b16 %v819, %v815
    %v1028 = vpack.c.b16 %v820, %v816
    %v1029 = vpack.c.b16 %v821, %v817
    %v1030 = vpack.c.b16 %v822, %v818
    %v1031 = vpack.c.b16 %v827, %v823
    %v1032 = vpack.c.b16 %v828, %v824
    %v1033 = vpack.c.b16 %v829, %v825
    %v1034 = vpack.c.b16 %v830, %v826
    %v1035 = vpack.c.b16 %v835, %v831
    %v1036 = vpack.c.b16 %v836, %v832
    %v1037 = vpack.c.b16 %v837, %v833
    %v1038 = vpack.c.b16 %v838, %v834
    %v1039 = vpack.c.b16 %v843, %v839
    %v1040 = vpack.c.b16 %v844, %v840
    %v1041 = vpack.c.b16 %v845, %v841
    %v1042 = vpack.c.b16 %v846, %v842
    %v1043 = vpack.c.b16 %v851, %v847
    %v1044 = vpack.c.b16 %v852, %v848
    %v1045 = vpack.c.b16 %v853, %v849
    %v1046 = vpack.c.b16 %v854, %v850
    %v1047 = vpack.c.b16 %v859, %v855
    %v1048 = vpack.c.b16 %v860, %v856
    %v1049 = vpack.c.b16 %v861, %v857
    %v1050 = vpack.c.b16 %v862, %v858
    %v1051 = vpack.c.b16 %v867, %v863
    %v1052 = vpack.c.b16 %v868, %v864
    %v1053 = vpack.c.b16 %v869, %v865
    %v1054 = vpack.c.b16 %v870, %v866
    %v1055 = vpack.c.b16 %v875, %v871
    %v1056 = vpack.c.b16 %v876, %v872
    %v1057 = vpack.c.b16 %v877, %v873
    %v1058 = vpack.c.b16 %v878, %v874
    %v1059 = vpack.c.b16 %v883, %v879
    %v1060 = vpack.c.b16 %v884, %v880
    %v1061 = vpack.c.b16 %v885, %v881
    %v1062 = vpack.c.b16 %v886, %v882
    %v1063 = vpack.c.b16 %v891, %v887
    %v1064 = vpack.c.b16 %v892, %v888
    %v1065 = vpack.c.b16 %v893, %v889
    %v1066 = vpack.c.b16 %v894, %v890
    %v1067 = vpack.c.b16 %v899, %v895
    %v1068 = vpack.c.b16 %v900, %v896
    %v1069 = vpack.c.b16 %v901, %v897
    %v1070 = vpack.c.b16 %v902, %v898
    %v1071 = vpack.c.b16 %v907, %v903
    %v1072 = vpack.c.b16 %v908, %v904
    %v1073 = vpack.c.b16 %v909, %v905
    %v1074 = vpack.c.b16 %v910, %v906
    %v1075 = vpack.c.b16 %v915, %v911
    %v1076 = vpack.c.b16 %v916, %v912
    %v1077 = vpack.c.b16 %v917, %v913
    %v1078 = vpack.c.b16 %v918, %v914
    %v1079 = vpack.c.b16 %v923, %v919
    %v1080 = vpack.c.b16 %v924, %v920
    %v1081 = vpack.c.b16 %v925, %v921
    %v1082 = vpack.c.b16 %v926, %v922
    %v1083 = vpack.c.b16 %v931, %v927
    %v1084 = vpack.c.b16 %v932, %v928
    %v1085 = vpack.c.b16 %v933, %v929
    %v1086 = vpack.c.b16 %v934, %v930
    %v1087 = vpack.c.b16 %v939, %v935
    %v1088 = vpack.c.b16 %v940, %v936
    %v1089 = vpack.c.b16 %v941, %v937
    %v1090 = vpack.c.b16 %v942, %v938
    %v1091 = vpack.c.b16 %v947, %v943
    %v1092 = vpack.c.b16 %v948, %v944
    %v1093 = vpack.c.b16 %v949, %v945
    %v1094 = vpack.c.b16 %v950, %v946
    %v1095 = vpack.c.b16 %v955, %v951
    %v1096 = vpack.c.b16 %v956, %v952
    %v1097 = vpack.c.b16 %v957, %v953
    %v1098 = vpack.c.b16 %v958, %v954
    %v1099 = vpack.c.b16 %v963, %v959
    %v1100 = vpack.c.b16 %v964, %v960
    %v1101 = vpack.c.b16 %v965, %v961
    %v1102 = vpack.c.b16 %v966, %v962
    %v1103 = vpack.c.b16 %v971, %v967
    %v1104 = vpack.c.b16 %v972, %v968
    %v1105 = vpack.c.b16 %v973, %v969
    %v1106 = vpack.c.b16 %v974, %v970
    %v1107 = vpack.c.b16 %v979, %v975
    %v1108 = vpack.c.b16 %v980, %v976
    %v1109 = vpack.c.b16 %v981, %v977
    %v1110 = vpack.c.b16 %v982, %v978
    %1239 = vmatprep.subr.bf16.mxu0 %v984
    %1240 = vmatpush1.bf16.msra.mxu0 %v983
    %1241 = vmatprep.subr.bf16.mxu0 %v988
    %1242 = vmatpush1.bf16.msra.mxu0 %v987
    %1243 = vmatprep.subr.bf16.mxu0 %v992
    %1244 = vmatpush1.bf16.msra.mxu0 %v991
    %1245 = vmatprep.subr.bf16.mxu0 %v996
    %1246 = vmatpush1.bf16.msra.mxu0 %v995
    %1247 = vmatprep.subr.bf16.mxu0 %v1000
    %1248 = vmatpush1.bf16.msra.mxu0 %v999
    %1249 = vmatprep.subr.bf16.mxu0 %v1004
    %1250 = vmatpush1.bf16.msra.mxu0 %v1003
    %1251 = vmatprep.subr.bf16.mxu0 %v1008
    %1252 = vmatpush1.bf16.msra.mxu0 %v1007
    %1253 = vmatprep.subr.bf16.mxu0 %v1012
    %1254 = vmatpush1.bf16.msra.mxu0 %v1011
    %1255 = vmatprep.subr.bf16.mxu0 %v1016
    %1256 = vmatpush1.bf16.msra.mxu0 %v1015
    %1257 = vmatprep.subr.bf16.mxu0 %v1020
    %1258 = vmatpush1.bf16.msra.mxu0 %v1019
    %1259 = vmatprep.subr.bf16.mxu0 %v1024
    %1260 = vmatpush1.bf16.msra.mxu0 %v1023
    %1261 = vmatprep.subr.bf16.mxu0 %v1028
    %1262 = vmatpush1.bf16.msra.mxu0 %v1027
    %1263 = vmatprep.subr.bf16.mxu0 %v1032
    %1264 = vmatpush1.bf16.msra.mxu0 %v1031
    %1265 = vmatprep.subr.bf16.mxu0 %v1036
    %1266 = vmatpush1.bf16.msra.mxu0 %v1035
    %1267 = vmatprep.subr.bf16.mxu0 %v1040
    %1268 = vmatpush1.bf16.msra.mxu0 %v1039
    %1269 = vmatprep.subr.bf16.mxu0 %v1044
    %1270 = vmatpush1.bf16.msra.mxu0 %v1043
    %1271 = vmatprep.mubr.bf16.mxu0 %v446
    %1272 = vmatmul.mubr.bf16.gmra.mrb[0].mxu0 %v445
    %v1273 = vpop.f32.mrb[0].mxu0
    %v1274 = vadd.f32 %v582, %v1273
    %v1275 = vpop.f32.mrb[0].mxu0
    %v1276 = vadd.f32 %v586, %v1275
    %v1277 = vpop.f32.mrb[0].mxu0
    %v1278 = vpop.f32.mrb[0].mxu0
    %1279 = vdwg.mxu0
    %1280 = vmatprep.subr.bf16.mxu0 %v1048
    %1281 = vmatpush1.bf16.msra.mxu0 %v1047
    %1282 = vmatprep.subr.bf16.mxu0 %v1052
    %1283 = vmatpush1.bf16.msra.mxu0 %v1051
    %1284 = vmatprep.subr.bf16.mxu0 %v1056
    %1285 = vmatpush1.bf16.msra.mxu0 %v1055
    %1286 = vmatprep.subr.bf16.mxu0 %v1060
    %1287 = vmatpush1.bf16.msra.mxu0 %v1059
    %1288 = vmatprep.subr.bf16.mxu0 %v1064
    %1289 = vmatpush1.bf16.msra.mxu0 %v1063
    %1290 = vmatprep.subr.bf16.mxu0 %v1068
    %1291 = vmatpush1.bf16.msra.mxu0 %v1067
    %1292 = vmatprep.subr.bf16.mxu0 %v1072
    %1293 = vmatpush1.bf16.msra.mxu0 %v1071
    %1294 = vmatprep.subr.bf16.mxu0 %v1076
    %1295 = vmatpush1.bf16.msra.mxu0 %v1075
    %1296 = vmatprep.subr.bf16.mxu0 %v1080
    %1297 = vmatpush1.bf16.msra.mxu0 %v1079
    %1298 = vmatprep.subr.bf16.mxu0 %v1084
    %1299 = vmatpush1.bf16.msra.mxu0 %v1083
    %1300 = vmatprep.subr.bf16.mxu0 %v1088
    %1301 = vmatpush1.bf16.msra.mxu0 %v1087
    %1302 = vmatprep.subr.bf16.mxu0 %v1092
    %1303 = vmatpush1.bf16.msra.mxu0 %v1091
    %1304 = vmatprep.subr.bf16.mxu0 %v1096
    %1305 = vmatpush1.bf16.msra.mxu0 %v1095
    %1306 = vmatprep.subr.bf16.mxu0 %v1100
    %1307 = vmatpush1.bf16.msra.mxu0 %v1099
    %1308 = vmatprep.subr.bf16.mxu0 %v1104
    %1309 = vmatpush1.bf16.msra.mxu0 %v1103
    %1310 = vmatprep.subr.bf16.mxu0 %v1108
    %1311 = vmatpush1.bf16.msra.mxu0 %v1107
    %1312 = vmatprep.mubr.bf16.mxu0 %v448
    %1313 = vmatmul.mubr.bf16.gmra.mrb[0].mxu0 %v447
    %v1314 = vpop.f32.mrb[0].mxu0
    %v1315 = vadd.f32 %v1274, %v1314
    %v1316 = vpop.f32.mrb[0].mxu0
    %v1317 = vadd.f32 %v1276, %v1316
    %v1318 = vpop.f32.mrb[0].mxu0
    %v1319 = vpop.f32.mrb[0].mxu0
    %1320 = vdwg.mxu0
    %1321 = vmatprep.subr.bf16.mxu0 %v986
    %1322 = vmatpush1.bf16.msra.mxu0 %v985
    %1323 = vmatprep.subr.bf16.mxu0 %v990
    %1324 = vmatpush1.bf16.msra.mxu0 %v989
    %1325 = vmatprep.subr.bf16.mxu0 %v994
    %1326 = vmatpush1.bf16.msra.mxu0 %v993
    %1327 = vmatprep.subr.bf16.mxu0 %v998
    %1328 = vmatpush1.bf16.msra.mxu0 %v997
    %1329 = vmatprep.subr.bf16.mxu0 %v1002
    %1330 = vmatpush1.bf16.msra.mxu0 %v1001
    %1331 = vmatprep.subr.bf16.mxu0 %v1006
    %1332 = vmatpush1.bf16.msra.mxu0 %v1005
    %1333 = vmatprep.subr.bf16.mxu0 %v1010
    %1334 = vmatpush1.bf16.msra.mxu0 %v1009
    %1335 = vmatprep.subr.bf16.mxu0 %v1014
    %1336 = vmatpush1.bf16.msra.mxu0 %v1013
    %1337 = vmatprep.subr.bf16.mxu0 %v1018
    %1338 = vmatpush1.bf16.msra.mxu0 %v1017
    %1339 = vmatprep.subr.bf16.mxu0 %v1022
    %1340 = vmatpush1.bf16.msra.mxu0 %v1021
    %1341 = vmatprep.subr.bf16.mxu0 %v1026
    %1342 = vmatpush1.bf16.msra.mxu0 %v1025
    %1343 = vmatprep.subr.bf16.mxu0 %v1030
    %1344 = vmatpush1.bf16.msra.mxu0 %v1029
    %1345 = vmatprep.subr.bf16.mxu0 %v1034
    %1346 = vmatpush1.bf16.msra.mxu0 %v1033
    %1347 = vmatprep.subr.bf16.mxu0 %v1038
    %1348 = vmatpush1.bf16.msra.mxu0 %v1037
    %1349 = vmatprep.subr.bf16.mxu0 %v1042
    %1350 = vmatpush1.bf16.msra.mxu0 %v1041
    %1351 = vmatprep.subr.bf16.mxu0 %v1046
    %1352 = vmatpush1.bf16.msra.mxu0 %v1045
    %1353 = vmatprep.mubr.bf16.mxu0 %v446
    %1354 = vmatmul.mubr.bf16.gmra.mrb[0].mxu0 %v445
    %v1355 = vpop.f32.mrb[0].mxu0
    %v1356 = vadd.f32 %v590, %v1355
    %v1357 = vpop.f32.mrb[0].mxu0
    %v1358 = vadd.f32 %v594, %v1357
    %v1359 = vpop.f32.mrb[0].mxu0
    %v1360 = vpop.f32.mrb[0].mxu0
    %1361 = vdwg.mxu0
    %1362 = vmatprep.subr.bf16.mxu0 %v1050
    %1363 = vmatpush1.bf16.msra.mxu0 %v1049
    %1364 = vmatprep.subr.bf16.mxu0 %v1054
    %1365 = vmatpush1.bf16.msra.mxu0 %v1053
    %1366 = vmatprep.subr.bf16.mxu0 %v1058
    %1367 = vmatpush1.bf16.msra.mxu0 %v1057
    %1368 = vmatprep.subr.bf16.mxu0 %v1062
    %1369 = vmatpush1.bf16.msra.mxu0 %v1061
    %1370 = vmatprep.subr.bf16.mxu0 %v1066
    %1371 = vmatpush1.bf16.msra.mxu0 %v1065
    %1372 = vmatprep.subr.bf16.mxu0 %v1070
    %1373 = vmatpush1.bf16.msra.mxu0 %v1069
    %1374 = vmatprep.subr.bf16.mxu0 %v1074
    %1375 = vmatpush1.bf16.msra.mxu0 %v1073
    %1376 = vmatprep.subr.bf16.mxu0 %v1078
    %1377 = vmatpush1.bf16.msra.mxu0 %v1077
    %1378 = vmatprep.subr.bf16.mxu0 %v1082
    %1379 = vmatpush1.bf16.msra.mxu0 %v1081
    %1380 = vmatprep.subr.bf16.mxu0 %v1086
    %1381 = vmatpush1.bf16.msra.mxu0 %v1085
    %1382 = vmatprep.subr.bf16.mxu0 %v1090
    %1383 = vmatpush1.bf16.msra.mxu0 %v1089
    %1384 = vmatprep.subr.bf16.mxu0 %v1094
    %1385 = vmatpush1.bf16.msra.mxu0 %v1093
    %1386 = vmatprep.subr.bf16.mxu0 %v1098
    %1387 = vmatpush1.bf16.msra.mxu0 %v1097
    %1388 = vmatprep.subr.bf16.mxu0 %v1102
    %1389 = vmatpush1.bf16.msra.mxu0 %v1101
    %1390 = vmatprep.subr.bf16.mxu0 %v1106
    %1391 = vmatpush1.bf16.msra.mxu0 %v1105
    %1392 = vmatprep.subr.bf16.mxu0 %v1110
    %1393 = vmatpush1.bf16.msra.mxu0 %v1109
    %1394 = vmatprep.mubr.bf16.mxu0 %v448
    %1395 = vmatmul.mubr.bf16.gmra.mrb[0].mxu0 %v447
    %v1396 = vpop.f32.mrb[0].mxu0
    %v1397 = vadd.f32 %v1356, %v1396
    %v1398 = vpop.f32.mrb[0].mxu0
    %v1399 = vadd.f32 %v1358, %v1398
    %v1400 = vpop.f32.mrb[0].mxu0
    %v1401 = vpop.f32.mrb[0].mxu0
    %1402 = vdwg.mxu0
    %vm1403 = vcmp.gt.f32.partialorder %v1315, 0.0
    %vm1404 = vcmp.gt.f32.partialorder %v1317, 0.0
    %vm1405 = vcmp.gt.f32.partialorder %v1397, 0.0
    %vm1406 = vcmp.gt.f32.partialorder %v1399, 0.0
    %v1407 = vmul.f32 %v1315, 0.2
    %v1408 = vmul.f32 %v1317, 0.2
    %v1409 = vmul.f32 %v1397, 0.2
    %v1410 = vmul.f32 %v1399, 0.2
    %v1411 = vsel %vm1403, %v1315, %v1407
    %v1412 = vsel %vm1404, %v1317, %v1408
    %v1413 = vsel %vm1405, %v1397, %v1409
    %v1414 = vsel %vm1406, %v1399, %v1410
    %v1415 = vpack.c.bf16 %v1411, %v1411
    %v1416 = vpack.c.bf16 %v1412, %v1412
    %v1417 = vpack.c.bf16 %v1413, %v1413
    %v1418 = vpack.c.bf16 %v1414, %v1414
    %v1419 = vld [vmem:[#allocation8] sm:$0xf]
    %v1420 = vld [vmem:[#allocation8 + $0x4] sm:$0xf]
    %v1421 = vld [vmem:[#allocation8 + $0x8] sm:$0xf]
    %v1422 = vld [vmem:[#allocation8 + $0xc] sm:$0xf]
    %v1423 = vld [vmem:[#allocation8 + $0x10] sm:$0xf]
    %v1424 = vld [vmem:[#allocation8 + $0x14] sm:$0xf]
    %v1425 = vld [vmem:[#allocation8 + $0x18] sm:$0xf]
    %v1426 = vld [vmem:[#allocation8 + $0x1c] sm:$0xf]
    %v1427 = vld [vmem:[#allocation8 + $0x20] sm:$0xf]
    %v1428 = vld [vmem:[#allocation8 + $0x24] sm:$0xf]
    %v1429 = vld [vmem:[#allocation8 + $0x28] sm:$0xf]
    %v1430 = vld [vmem:[#allocation8 + $0x2c] sm:$0xf]
    %v1431 = vld [vmem:[#allocation8 + $0x30] sm:$0xf]
    %v1432 = vld [vmem:[#allocation8 + $0x34] sm:$0xf]
    %v1433 = vld [vmem:[#allocation8 + $0x38] sm:$0xf]
    %v1434 = vld [vmem:[#allocation8 + $0x3c] sm:$0xf]
    %v1435 = vld [vmem:[#allocation8 + $0x40] sm:$0xf]
    %v1436 = vld [vmem:[#allocation8 + $0x44] sm:$0xf]
    %v1437 = vld [vmem:[#allocation8 + $0x48] sm:$0xf]
    %v1438 = vld [vmem:[#allocation8 + $0x4c] sm:$0xf]
    %v1439 = vld [vmem:[#allocation8 + $0x50] sm:$0xf]
    %v1440 = vld [vmem:[#allocation8 + $0x54] sm:$0xf]
    %v1441 = vld [vmem:[#allocation8 + $0x58] sm:$0xf]
    %v1442 = vld [vmem:[#allocation8 + $0x5c] sm:$0xf]
    %v1443 = vld [vmem:[#allocation8 + $0x60] sm:$0xf]
    %v1444 = vld [vmem:[#allocation8 + $0x64] sm:$0xf]
    %v1445 = vld [vmem:[#allocation8 + $0x68] sm:$0xf]
    %v1446 = vld [vmem:[#allocation8 + $0x6c] sm:$0xf]
    %v1447 = vld [vmem:[#allocation8 + $0x70] sm:$0xf]
    %v1448 = vld [vmem:[#allocation8 + $0x74] sm:$0xf]
    %v1449 = vld [vmem:[#allocation8 + $0x78] sm:$0xf]
    %v1450 = vld [vmem:[#allocation8 + $0x7c] sm:$0xf]
    %v1451 = vld [vmem:[#allocation8 + $0x80] sm:$0xf]
    %v1452 = vld [vmem:[#allocation8 + $0x84] sm:$0xf]
    %v1453 = vld [vmem:[#allocation8 + $0x88] sm:$0xf]
    %v1454 = vld [vmem:[#allocation8 + $0x8c] sm:$0xf]
    %v1455 = vld [vmem:[#allocation8 + $0x90] sm:$0xf]
    %v1456 = vld [vmem:[#allocation8 + $0x94] sm:$0xf]
    %v1457 = vld [vmem:[#allocation8 + $0x98] sm:$0xf]
    %v1458 = vld [vmem:[#allocation8 + $0x9c] sm:$0xf]
    %v1459 = vld [vmem:[#allocation8 + $0xa0] sm:$0xf]
    %v1460 = vld [vmem:[#allocation8 + $0xa4] sm:$0xf]
    %v1461 = vld [vmem:[#allocation8 + $0xa8] sm:$0xf]
    %v1462 = vld [vmem:[#allocation8 + $0xac] sm:$0xf]
    %v1463 = vld [vmem:[#allocation8 + $0xb0] sm:$0xf]
    %v1464 = vld [vmem:[#allocation8 + $0xb4] sm:$0xf]
    %v1465 = vld [vmem:[#allocation8 + $0xb8] sm:$0xf]
    %v1466 = vld [vmem:[#allocation8 + $0xbc] sm:$0xf]
    %v1467 = vld [vmem:[#allocation8 + $0xc0] sm:$0xf]
    %v1468 = vld [vmem:[#allocation8 + $0xc4] sm:$0xf]
    %v1469 = vld [vmem:[#allocation8 + $0xc8] sm:$0xf]
    %v1470 = vld [vmem:[#allocation8 + $0xcc] sm:$0xf]
    %v1471 = vld [vmem:[#allocation8 + $0xd0] sm:$0xf]
    %v1472 = vld [vmem:[#allocation8 + $0xd4] sm:$0xf]
    %v1473 = vld [vmem:[#allocation8 + $0xd8] sm:$0xf]
    %v1474 = vld [vmem:[#allocation8 + $0xdc] sm:$0xf]
    %v1475 = vld [vmem:[#allocation8 + $0xe0] sm:$0xf]
    %v1476 = vld [vmem:[#allocation8 + $0xe4] sm:$0xf]
    %v1477 = vld [vmem:[#allocation8 + $0xe8] sm:$0xf]
    %v1478 = vld [vmem:[#allocation8 + $0xec] sm:$0xf]
    %v1479 = vld [vmem:[#allocation8 + $0xf0] sm:$0xf]
    %v1480 = vld [vmem:[#allocation8 + $0xf4] sm:$0xf]
    %v1481 = vld [vmem:[#allocation8 + $0xf8] sm:$0xf]
    %v1482 = vld [vmem:[#allocation8 + $0xfc] sm:$0xf]
    %v1483 = vld [vmem:[%s10] sm:$0x1]
    %v1485 = vlaneseq
    %v1486 = vshrl.u32 %v1485, 7
    %v1487 = vsub.s32 0, %v1486
    %v1488 = vrot.slane %v1483, %v1487
    %v1554 = vunpack.c.l.b16 %v1419
    %v1555 = vunpack.c.l.b16 %v1420
    %v1556 = vunpack.c.l.b16 %v1421
    %v1557 = vunpack.c.l.b16 %v1422
    %v1558 = vunpack.c.l.b16 %v1423
    %v1559 = vunpack.c.l.b16 %v1424
    %v1560 = vunpack.c.l.b16 %v1425
    %v1561 = vunpack.c.l.b16 %v1426
    %v1562 = vunpack.c.l.b16 %v1427
    %v1563 = vunpack.c.l.b16 %v1428
    %v1564 = vunpack.c.l.b16 %v1429
    %v1565 = vunpack.c.l.b16 %v1430
    %v1566 = vunpack.c.l.b16 %v1431
    %v1567 = vunpack.c.l.b16 %v1432
    %v1568 = vunpack.c.l.b16 %v1433
    %v1569 = vunpack.c.l.b16 %v1434
    %v1570 = vunpack.c.l.b16 %v1435
    %v1571 = vunpack.c.l.b16 %v1436
    %v1572 = vunpack.c.l.b16 %v1437
    %v1573 = vunpack.c.l.b16 %v1438
    %v1574 = vunpack.c.l.b16 %v1439
    %v1575 = vunpack.c.l.b16 %v1440
    %v1576 = vunpack.c.l.b16 %v1441
    %v1577 = vunpack.c.l.b16 %v1442
    %v1578 = vunpack.c.l.b16 %v1443
    %v1579 = vunpack.c.l.b16 %v1444
    %v1580 = vunpack.c.l.b16 %v1445
    %v1581 = vunpack.c.l.b16 %v1446
    %v1582 = vunpack.c.l.b16 %v1447
    %v1583 = vunpack.c.l.b16 %v1448
    %v1584 = vunpack.c.l.b16 %v1449
    %v1585 = vunpack.c.l.b16 %v1450
    %v1586 = vunpack.c.l.b16 %v1451
    %v1587 = vunpack.c.l.b16 %v1452
    %v1588 = vunpack.c.l.b16 %v1453
    %v1589 = vunpack.c.l.b16 %v1454
    %v1590 = vunpack.c.l.b16 %v1455
    %v1591 = vunpack.c.l.b16 %v1456
    %v1592 = vunpack.c.l.b16 %v1457
    %v1593 = vunpack.c.l.b16 %v1458
    %v1594 = vunpack.c.l.b16 %v1459
    %v1595 = vunpack.c.l.b16 %v1460
    %v1596 = vunpack.c.l.b16 %v1461
    %v1597 = vunpack.c.l.b16 %v1462
    %v1598 = vunpack.c.l.b16 %v1463
    %v1599 = vunpack.c.l.b16 %v1464
    %v1600 = vunpack.c.l.b16 %v1465
    %v1601 = vunpack.c.l.b16 %v1466
    %v1602 = vunpack.c.l.b16 %v1467
    %v1603 = vunpack.c.l.b16 %v1468
    %v1604 = vunpack.c.l.b16 %v1469
    %v1605 = vunpack.c.l.b16 %v1470
    %v1606 = vunpack.c.l.b16 %v1471
    %v1607 = vunpack.c.l.b16 %v1472
    %v1608 = vunpack.c.l.b16 %v1473
    %v1609 = vunpack.c.l.b16 %v1474
    %v1610 = vunpack.c.l.b16 %v1475
    %v1611 = vunpack.c.l.b16 %v1476
    %v1612 = vunpack.c.l.b16 %v1477
    %v1613 = vunpack.c.l.b16 %v1478
    %v1614 = vunpack.c.l.b16 %v1479
    %v1615 = vunpack.c.l.b16 %v1480
    %v1616 = vunpack.c.l.b16 %v1481
    %v1617 = vunpack.c.l.b16 %v1482
    %v1618 = vpack.c.b16 %v1555, %v1554
    %v1619 = vpack.c.b16 %v1557, %v1556
    %v1620 = vpack.c.b16 %v1559, %v1558
    %v1621 = vpack.c.b16 %v1561, %v1560
    %v1622 = vpack.c.b16 %v1563, %v1562
    %v1623 = vpack.c.b16 %v1565, %v1564
    %v1624 = vpack.c.b16 %v1567, %v1566
    %v1625 = vpack.c.b16 %v1569, %v1568
    %v1626 = vpack.c.b16 %v1571, %v1570
    %v1627 = vpack.c.b16 %v1573, %v1572
    %v1628 = vpack.c.b16 %v1575, %v1574
    %v1629 = vpack.c.b16 %v1577, %v1576
    %v1630 = vpack.c.b16 %v1579, %v1578
    %v1631 = vpack.c.b16 %v1581, %v1580
    %v1632 = vpack.c.b16 %v1583, %v1582
    %v1633 = vpack.c.b16 %v1585, %v1584
    %v1634 = vpack.c.b16 %v1587, %v1586
    %v1635 = vpack.c.b16 %v1589, %v1588
    %v1636 = vpack.c.b16 %v1591, %v1590
    %v1637 = vpack.c.b16 %v1593, %v1592
    %v1638 = vpack.c.b16 %v1595, %v1594
    %v1639 = vpack.c.b16 %v1597, %v1596
    %v1640 = vpack.c.b16 %v1599, %v1598
    %v1641 = vpack.c.b16 %v1601, %v1600
    %v1642 = vpack.c.b16 %v1603, %v1602
    %v1643 = vpack.c.b16 %v1605, %v1604
    %v1644 = vpack.c.b16 %v1607, %v1606
    %v1645 = vpack.c.b16 %v1609, %v1608
    %v1646 = vpack.c.b16 %v1611, %v1610
    %v1647 = vpack.c.b16 %v1613, %v1612
    %v1648 = vpack.c.b16 %v1615, %v1614
    %v1649 = vpack.c.b16 %v1617, %v1616
    %1682 = vmatprep.subr.bf16.mxu0 0
    %1683 = vmatpush1.bf16.msra.mxu0 %v1618
    %1684 = vmatprep.subr.bf16.mxu0 0
    %1685 = vmatpush1.bf16.msra.mxu0 %v1619
    %1686 = vmatprep.subr.bf16.mxu0 0
    %1687 = vmatpush1.bf16.msra.mxu0 %v1620
    %1688 = vmatprep.subr.bf16.mxu0 0
    %1689 = vmatpush1.bf16.msra.mxu0 %v1621
    %1690 = vmatprep.subr.bf16.mxu0 0
    %1691 = vmatpush1.bf16.msra.mxu0 %v1622
    %1692 = vmatprep.subr.bf16.mxu0 0
    %1693 = vmatpush1.bf16.msra.mxu0 %v1623
    %1694 = vmatprep.subr.bf16.mxu0 0
    %1695 = vmatpush1.bf16.msra.mxu0 %v1624
    %1696 = vmatprep.subr.bf16.mxu0 0
    %1697 = vmatpush1.bf16.msra.mxu0 %v1625
    %1698 = vmatprep.subr.bf16.mxu0 0
    %1699 = vmatpush1.bf16.msra.mxu0 %v1626
    %1700 = vmatprep.subr.bf16.mxu0 0
    %1701 = vmatpush1.bf16.msra.mxu0 %v1627
    %1702 = vmatprep.subr.bf16.mxu0 0
    %1703 = vmatpush1.bf16.msra.mxu0 %v1628
    %1704 = vmatprep.subr.bf16.mxu0 0
    %1705 = vmatpush1.bf16.msra.mxu0 %v1629
    %1706 = vmatprep.subr.bf16.mxu0 0
    %1707 = vmatpush1.bf16.msra.mxu0 %v1630
    %1708 = vmatprep.subr.bf16.mxu0 0
    %1709 = vmatpush1.bf16.msra.mxu0 %v1631
    %1710 = vmatprep.subr.bf16.mxu0 0
    %1711 = vmatpush1.bf16.msra.mxu0 %v1632
    %1712 = vmatprep.subr.bf16.mxu0 0
    %1713 = vmatpush1.bf16.msra.mxu0 %v1633
    %1714 = vmatprep.mubr.bf16.mxu0 %v1416
    %1715 = vmatmul.mubr.bf16.gmra.mrb[0].mxu0 %v1415
    %v1716 = vpop.f32.mrb[0].mxu0
    %v1717 = vadd.f32 %v1488, %v1716
    %v1718 = vpop.f32.mrb[0].mxu0
    %v1719 = vpop.f32.mrb[0].mxu0
    %v1720 = vpop.f32.mrb[0].mxu0
    %1721 = vdwg.mxu0
    %1722 = vmatprep.subr.bf16.mxu0 0
    %1723 = vmatpush1.bf16.msra.mxu0 %v1634
    %1724 = vmatprep.subr.bf16.mxu0 0
    %1725 = vmatpush1.bf16.msra.mxu0 %v1635
    %1726 = vmatprep.subr.bf16.mxu0 0
    %1727 = vmatpush1.bf16.msra.mxu0 %v1636
    %1728 = vmatprep.subr.bf16.mxu0 0
    %1729 = vmatpush1.bf16.msra.mxu0 %v1637
    %1730 = vmatprep.subr.bf16.mxu0 0
    %1731 = vmatpush1.bf16.msra.mxu0 %v1638
    %1732 = vmatprep.subr.bf16.mxu0 0
    %1733 = vmatpush1.bf16.msra.mxu0 %v1639
    %1734 = vmatprep.subr.bf16.mxu0 0
    %1735 = vmatpush1.bf16.msra.mxu0 %v1640
    %1736 = vmatprep.subr.bf16.mxu0 0
    %1737 = vmatpush1.bf16.msra.mxu0 %v1641
    %1738 = vmatprep.subr.bf16.mxu0 0
    %1739 = vmatpush1.bf16.msra.mxu0 %v1642
    %1740 = vmatprep.subr.bf16.mxu0 0
    %1741 = vmatpush1.bf16.msra.mxu0 %v1643
    %1742 = vmatprep.subr.bf16.mxu0 0
    %1743 = vmatpush1.bf16.msra.mxu0 %v1644
    %1744 = vmatprep.subr.bf16.mxu0 0
    %1745 = vmatpush1.bf16.msra.mxu0 %v1645
    %1746 = vmatprep.subr.bf16.mxu0 0
    %1747 = vmatpush1.bf16.msra.mxu0 %v1646
    %1748 = vmatprep.subr.bf16.mxu0 0
    %1749 = vmatpush1.bf16.msra.mxu0 %v1647
    %1750 = vmatprep.subr.bf16.mxu0 0
    %1751 = vmatpush1.bf16.msra.mxu0 %v1648
    %1752 = vmatprep.subr.bf16.mxu0 0
    %1753 = vmatpush1.bf16.msra.mxu0 %v1649
    %1754 = vmatprep.mubr.bf16.mxu0 %v1418
    %1755 = vmatmul.mubr.bf16.gmra.mrb[0].mxu0 %v1417
    %v1756 = vpop.f32.mrb[0].mxu0
    %v1757 = vadd.f32 %v1717, %v1756
    %v1758 = vpop.f32.mrb[0].mxu0
    %v1759 = vpop.f32.mrb[0].mxu0
    %v1760 = vpop.f32.mrb[0].mxu0
    %1761 = vdwg.mxu0
    %v1762 = vxor.u32 %v1757, 2147483648
    %v1763 = vmul.f32 %v1762, 1.442695
    %v1764 = vpow.pop %v1763
    %v1765 = vadd.f32 %v1764, 1.0
    %v1766 = vrcp.pop %v1765
    %v1767 = vmul.f32 1.0, %v1766
    %1768 = vst [vmem:[#allocation10] sm:$0xff] %v1767
    // Predicated region
    $region62: #{tpu_custom_call.1} parent=1 // pred_check
      _
    $region63: #{tpu_custom_call.1} parent=1 // pred_check_branch
      %1770 = sbr.rel (0) target = $region65
    $region64: #{tpu_custom_call.1} parent=1 // pred_region
      %s1772 = ssub.s32 128, 128
      %1773 = vsyncadd [#allocation4], %s1772
      %s1775 = sshll.u32 [#allocation10], 4
      %s1776 = int_to_ptr.vmem [resolvable:$true] %s1775
      %1778 = dma.vmem_to_hbm [thread:$0]  %s1776, 128, %s11, [#allocation4]
    $region65: #{tpu_custom_call.1} parent=1 // pred_fallthru
      _
    // Predicated region
    $region66: #{tpu_custom_call.1} parent=1 // pred_check
      _
    $region67: #{tpu_custom_call.1} parent=1 // pred_check_branch
      %1780 = sbr.rel (0) target = $region69
    $region68: #{tpu_custom_call.1} parent=1 // pred_region
      %1781 = dma.done [#allocation4], 128
    $region69: #{tpu_custom_call.1} parent=1 // pred_fallthru
      _
    %1782 = vsyncpa [#allocation3], 1
    %1783 = vsyncpa [#allocation6], 1
    %1784 = vsyncpa [#allocation9], 1
    %1785 = vsyncpa [#allocation4], 1

</llo_original>
